<compile_context>
chip_gen: v6e
topology: v6e:2x2x1
jax: 0.10.0
libtpu: 0.0.40
codegen_flags: <defaults>
</compile_context>

<pallas_src>
import functools

import jax
import jax.numpy as jnp
from jax.experimental import pallas as pl
from jax.experimental.pallas import tpu as pltpu

INPUT_SIZE = 784      # multiple of 16 -> no K padding needed for bf16
HIDDEN_SIZE = 500
NUM_CLASSES = 10

# Lane-aligned (multiple-of-128) padded feature dims.
H_PAD = 512   # 500 -> 512
C_PAD = 128   # 10  -> 128


def _round_up(n, m):
    return ((n + m - 1) // m) * m


def _choose_batch_tiling(batch, tb_max):
    """Pick (Bp, tb): Bp is the padded batch (multiple of 16), tb divides Bp."""
    b16 = _round_up(max(batch, 1), 16)      # bf16 sublane multiple
    if b16 <= tb_max:
        tb = b16                            # single tile, minimal wasted rows
        # v7x has 2 TensorCores: split one big tile so "parallel" can shard it.
        if tb >= 1024 and (tb // 2) % 16 == 0:
            tb //= 2
    else:
        tb = tb_max
    bp = _round_up(b16, tb)
    return bp, tb


def _mlp_kernel(x_ref, w1_ref, b1_ref, w2_ref, b2_ref, o_ref):
    # Layer 1: bf16 operands on the MXU, f32 accumulation.
    h = jnp.dot(x_ref[...], w1_ref[...], preferred_element_type=jnp.float32)
    # Bias + ReLU in f32 on the VPU (rides for free under the MXU work).
    h = jnp.maximum(h + b1_ref[...], 0.0)
    # Layer 2: cast activations back to bf16 for the MXU, accumulate in f32.
    out = jnp.dot(h.astype(jnp.bfloat16), w2_ref[...],
                  preferred_element_type=jnp.float32)
    o_ref[...] = (out + b2_ref[...]).astype(o_ref.dtype)


def prepare_params(w1, b1, w2, b2):
    """One-time parameter prep: zero-pad to lane-aligned shapes, cast to bf16.

    Call this once and reuse the result for every forward call; the padded
    regions are exact zeros so the padded output columns stay zero.
      w1: (784, 500) f32 (transpose of PyTorch l1.weight), b1: (500,) f32
      w2: (500, 10)  f32 (transpose of PyTorch l2.weight), b2: (10,)  f32
    """
    w1p = jnp.zeros((INPUT_SIZE, H_PAD), jnp.bfloat16)
    w1p = w1p.at[:, :HIDDEN_SIZE].set(w1.astype(jnp.bfloat16))
    b1p = jnp.zeros((1, H_PAD), jnp.float32)
    b1p = b1p.at[:, :HIDDEN_SIZE].set(b1.reshape(1, HIDDEN_SIZE).astype(jnp.float32))
    w2p = jnp.zeros((H_PAD, C_PAD), jnp.bfloat16)
    w2p = w2p.at[:HIDDEN_SIZE, :NUM_CLASSES].set(w2.astype(jnp.bfloat16))
    b2p = jnp.zeros((1, C_PAD), jnp.float32)
    b2p = b2p.at[:, :NUM_CLASSES].set(b2.reshape(1, NUM_CLASSES).astype(jnp.float32))
    return w1p, b1p, w2p, b2p


@functools.partial(jax.jit, static_argnames=("tb_max",))
def neural_net_forward(x, w1p, b1p, w2p, b2p, *, tb_max=1024):
    """y = relu(x @ w1 + b1) @ w2 + b2 in one batch-tiled Pallas call.

    x: (B, 784) f32.  w1p/b1p/w2p/b2p come from `prepare_params` (pre-padded,
    weights in bf16).  Returns (B, 10) f32.
    """
    B = x.shape[0]
    Bp, tb = _choose_batch_tiling(B, tb_max)

    # Per-call activation prep only: pad the batch (multiple of 16) + bf16 cast.
    if Bp == B:
        xp = x.astype(jnp.bfloat16)
    else:
        xp = jnp.zeros((Bp, INPUT_SIZE), jnp.bfloat16).at[:B].set(
            x.astype(jnp.bfloat16))

    grid = (Bp // tb,)
    flops = 2 * Bp * (INPUT_SIZE * H_PAD + H_PAD * C_PAD)
    bytes_accessed = (xp.size * 2 + w1p.size * 2 + w2p.size * 2
                      + b1p.size * 4 + b2p.size * 4 + Bp * C_PAD * 4)

    out_padded = pl.pallas_call(
        _mlp_kernel,
        out_shape=jax.ShapeDtypeStruct((Bp, C_PAD), jnp.float32),
        grid_spec=pltpu.PrefetchScalarGridSpec(
            num_scalar_prefetch=0,
            grid=grid,
            in_specs=[
                # x tile: streamed / double-buffered over the batch grid.
                # K = 784 spans the full array dim (exempt from 128 rule).
                pl.BlockSpec((tb, INPUT_SIZE), lambda i: (i, 0)),
                # Weights + biases: constant index_map -> fetched from HBM
                # once and VMEM-resident across all grid steps.
                pl.BlockSpec((INPUT_SIZE, H_PAD), lambda i: (0, 0)),
                pl.BlockSpec((1, H_PAD), lambda i: (0, 0)),
                pl.BlockSpec((H_PAD, C_PAD), lambda i: (0, 0)),
                pl.BlockSpec((1, C_PAD), lambda i: (0, 0)),
            ],
            out_specs=pl.BlockSpec((tb, C_PAD), lambda i: (i, 0)),
        ),
        compiler_params=pltpu.CompilerParams(
            # Batch tiles are independent -> megacore sharding on v7x.
            dimension_semantics=("parallel",),
            # ~8-10 MiB used at tb=1024; explicit limit is safe on v5e/v6e/v7x.
            vmem_limit_bytes=32 * 1024 * 1024,
        ),
        cost_estimate=pl.CostEstimate(
            flops=flops, transcendentals=0, bytes_accessed=bytes_accessed),
    )(xp, w1p, b1p, w2p, b2p)

    # Slice off batch padding and class padding (padded columns are exact zeros).
    return out_padded[:B, :NUM_CLASSES]


def init_params(key):
    """Deterministic init mirroring nn.Linear's uniform(-1/sqrt(fan_in), +)."""
    k1, k2, k3, k4 = jax.random.split(key, 4)
    bound1 = 1.0 / jnp.sqrt(INPUT_SIZE)
    bound2 = 1.0 / jnp.sqrt(HIDDEN_SIZE)
    w1 = jax.random.uniform(k1, (INPUT_SIZE, HIDDEN_SIZE), jnp.float32,
                            minval=-bound1, maxval=bound1)
    b1 = jax.random.uniform(k2, (HIDDEN_SIZE,), jnp.float32,
                            minval=-bound1, maxval=bound1)
    w2 = jax.random.uniform(k3, (HIDDEN_SIZE, NUM_CLASSES), jnp.float32,
                            minval=-bound2, maxval=bound2)
    b2 = jax.random.uniform(k4, (NUM_CLASSES,), jnp.float32,
                            minval=-bound2, maxval=bound2)
    return w1, b1, w2, b2


if __name__ == "__main__":
    key = jax.random.PRNGKey(0)
    kx, kp = jax.random.split(key)

    batch = 8
    x = jax.random.normal(kx, (batch, INPUT_SIZE), dtype=jnp.float32)
    w1, b1, w2, b2 = init_params(kp)

    # One-time weight prep (hoisted off the per-call latency path).
    params = prepare_params(w1, b1, w2, b2)
    params = tuple(jax.block_until_ready(p) for p in params)

    out = neural_net_forward(x, *params)
    out = jax.block_until_ready(out)
    assert out.shape == (batch, NUM_CLASSES)
    assert out.dtype == jnp.float32

    # Reference mirroring the kernel's bf16-operand / f32-accumulate math.
    xb = x.astype(jnp.bfloat16)
    h_ref = jnp.maximum(
        jnp.dot(xb, w1.astype(jnp.bfloat16),
                preferred_element_type=jnp.float32) + b1, 0.0)
    ref_bf16 = jnp.dot(h_ref.astype(jnp.bfloat16), w2.astype(jnp.bfloat16),
                       preferred_element_type=jnp.float32) + b2
    assert jnp.allclose(out, ref_bf16, atol=2e-2, rtol=2e-2)

    # Sanity check vs full-f32 PyTorch semantics (looser tol: bf16 operands are
    # an intentional inference-precision contract).
    ref_f32 = jnp.maximum(x @ w1 + b1, 0.0) @ w2 + b2
    assert jnp.allclose(out, ref_f32, atol=8e-2, rtol=8e-2)

    print("KERNEL_OK")
</pallas_src>

<mosaic_0001>
module attributes {stable_mosaic.version = 11 : i64} {
  func.func @_mlp_kernel(%arg0: i32, %arg1: memref<16x784xbf16, #tpu.memory_space<vmem>>, %arg2: memref<784x512xbf16, #tpu.memory_space<vmem>>, %arg3: memref<1x512xf32, #tpu.memory_space<vmem>>, %arg4: memref<512x128xbf16, #tpu.memory_space<vmem>>, %arg5: memref<1x128xf32, #tpu.memory_space<vmem>>, %arg6: memref<16x128xf32, #tpu.memory_space<vmem>>) attributes {dimension_semantics = [#tpu.dimension_semantics<parallel>], iteration_bounds = array<i64: 1>, scalar_prefetch = 0 : i64, scratch_operands = 0 : i64, tpu.core_type = #tpu.core_type<tc>, window_params = [{transform_indices = @transform_0, window_bounds = array<i64: 16, 784>}, {pipeline_mode = #tpu.pipeline_mode<synchronous>, transform_indices = @transform_1, window_bounds = array<i64: 784, 512>}, {pipeline_mode = #tpu.pipeline_mode<synchronous>, transform_indices = @transform_2, window_bounds = array<i64: 1, 512>}, {pipeline_mode = #tpu.pipeline_mode<synchronous>, transform_indices = @transform_3, window_bounds = array<i64: 512, 128>}, {pipeline_mode = #tpu.pipeline_mode<synchronous>, transform_indices = @transform_4, window_bounds = array<i64: 1, 128>}, {transform_indices = @transform_5, window_bounds = array<i64: 16, 128>}]} {
    %c0 = arith.constant 0 : index
    %c0_0 = arith.constant 0 : index
    %0 = vector.load %arg1[%c0, %c0_0] : memref<16x784xbf16, #tpu.memory_space<vmem>>, vector<16x784xbf16>
    %c0_1 = arith.constant 0 : index
    %c0_2 = arith.constant 0 : index
    %1 = vector.load %arg2[%c0_1, %c0_2] : memref<784x512xbf16, #tpu.memory_space<vmem>>, vector<784x512xbf16>
    %cst = arith.constant dense<0.000000e+00> : vector<16x512xf32>
    %2 = tpu.matmul %0, %1, %cst {dimension_numbers = #tpu.dot_dimension_numbers<[1], [0], [0], [1], [0, 0, 1, 1], [], []>} : vector<16x784xbf16>, vector<784x512xbf16>, vector<16x512xf32> -> vector<16x512xf32>
    %c0_3 = arith.constant 0 : index
    %c0_4 = arith.constant 0 : index
    %3 = vector.load %arg3[%c0_3, %c0_4] : memref<1x512xf32, #tpu.memory_space<vmem>>, vector<1x512xf32>
    %4 = vector.broadcast %3 : vector<1x512xf32> to vector<16x512xf32>
    %5 = arith.addf %2, %4 : vector<16x512xf32>
    %cst_5 = arith.constant 0.000000e+00 : f32
    %6 = vector.broadcast %cst_5 : f32 to vector<16x512xf32>
    %7 = arith.maximumf %5, %6 : vector<16x512xf32>
    %8 = arith.truncf %7 : vector<16x512xf32> to vector<16x512xbf16>
    %c0_6 = arith.constant 0 : index
    %c0_7 = arith.constant 0 : index
    %9 = vector.load %arg4[%c0_6, %c0_7] : memref<512x128xbf16, #tpu.memory_space<vmem>>, vector<512x128xbf16>
    %cst_8 = arith.constant dense<0.000000e+00> : vector<16x128xf32>
    %10 = tpu.matmul %8, %9, %cst_8 {dimension_numbers = #tpu.dot_dimension_numbers<[1], [0], [0], [1], [0, 0, 1, 1], [], []>} : vector<16x512xbf16>, vector<512x128xbf16>, vector<16x128xf32> -> vector<16x128xf32>
    %c0_9 = arith.constant 0 : index
    %c0_10 = arith.constant 0 : index
    %11 = vector.load %arg5[%c0_9, %c0_10] : memref<1x128xf32, #tpu.memory_space<vmem>>, vector<1x128xf32>
    %12 = vector.broadcast %11 : vector<1x128xf32> to vector<16x128xf32>
    %13 = arith.addf %10, %12 : vector<16x128xf32>
    %c0_11 = arith.constant 0 : index
    %c0_12 = arith.constant 0 : index
    %14 = vector.load %arg6[%c0_11, %c0_12] : memref<16x128xf32, #tpu.memory_space<vmem>>, vector<16x128xf32>
    tpu.vector_store %arg6[%c0_11, %c0_12], %13 {strides = array<i32>} : memref<16x128xf32, #tpu.memory_space<vmem>>, vector<16x128xf32>,
    return
  }
  func.func @transform_0(%arg0: i32) -> (i32, i32) {
    %c0_i32 = arith.constant 0 : i32
    %c0_i32_0 = arith.constant 0 : i32
    return %arg0, %c0_i32 : i32, i32
  }
  func.func @transform_1(%arg0: i32) -> (i32, i32) {
    %c0_i32 = arith.constant 0 : i32
    %c0_i32_0 = arith.constant 0 : i32
    %c0_i32_1 = arith.constant 0 : i32
    return %c0_i32, %c0_i32_0 : i32, i32
  }
  func.func @transform_2(%arg0: i32) -> (i32, i32) {
    %c0_i32 = arith.constant 0 : i32
    %c0_i32_0 = arith.constant 0 : i32
    %c0_i32_1 = arith.constant 0 : i32
    return %c0_i32, %c0_i32_0 : i32, i32
  }
  func.func @transform_3(%arg0: i32) -> (i32, i32) {
    %c0_i32 = arith.constant 0 : i32
    %c0_i32_0 = arith.constant 0 : i32
    %c0_i32_1 = arith.constant 0 : i32
    return %c0_i32, %c0_i32_0 : i32, i32
  }
  func.func @transform_4(%arg0: i32) -> (i32, i32) {
    %c0_i32 = arith.constant 0 : i32
    %c0_i32_0 = arith.constant 0 : i32
    %c0_i32_1 = arith.constant 0 : i32
    return %c0_i32, %c0_i32_0 : i32, i32
  }
  func.func @transform_5(%arg0: i32) -> (i32, i32) {
    %c0_i32 = arith.constant 0 : i32
    %c0_i32_0 = arith.constant 0 : i32
    return %arg0, %c0_i32 : i32, i32
  }
}

</mosaic_0001>

<llo_original>
// kernel: neural_net_forward.1
$region0: #{neural_net_forward.1}
  #allocation0 [shape = 'u32[]', space=smem, size = 0x4, offset = 0x4, fixed_abs, tag = 'smem constant byte address 0x4 - core index']
  #allocation1 [shape = 'u32[144,128]{1,0:T(1,128)}', space=vmem, size = 0x12000, scoped, tag = 'internal scratch']
  %s0 = inlined_call_operand.vmem [shape: bf16[16,784], index: 0, kind: input, shape index: {}]
  %s1 = inlined_call_operand.hbm [shape: bf16[784,512], index: 1, kind: input, shape index: {}]
  %s2 = inlined_call_operand.vmem [shape: f32[1,512], index: 2, kind: input, shape index: {}]
  %s3 = inlined_call_operand.hbm [shape: bf16[512,128], index: 3, kind: input, shape index: {}]
  %s4 = inlined_call_operand.vmem [shape: f32[1,128], index: 4, kind: input, shape index: {}]
  %s5 = inlined_call_operand.vmem [shape: f32[16,128], index: 5, kind: output, shape index: {}]
  %s6 = sld [smem:[#allocation0]]
  $region38: #{neural_net_forward.1} parent=0
    _
  %s8 = ssub.s32 1, %s6
  %s9 = scalar_select 0, %s8, %s6
  $region1: #{neural_net_forward.1} parent=0
    #allocation2 [shape = 'u8[802816]{0}', space=vmem, size = 0xc4000, scoped, tag = 'input window, operand 1, single buffered']
    #allocation3 [shape = 's32[1]{0}', space=sflag, size = 0x4, scoped, tag = 'scoped memory for neural_net_forward.1']
    #allocation4 [shape = 'u8[131072]{0}', space=vmem, size = 0x20000, scoped, tag = 'input window, operand 3, single buffered']
    #allocation5 [shape = 's32[1]{0}', space=sflag, size = 0x4, scoped, tag = 'scoped memory for neural_net_forward.1']
    %10 = vsyncpa [#allocation3], 0
    %11 = vsyncpa [#allocation5], 0
    // Predicated region
    $region2: #{neural_net_forward.1} parent=1 // pred_check
      _
    $region3: #{neural_net_forward.1} parent=1 // pred_check_branch
      %13 = sbr.rel (0) target = $region5
    $region4: #{neural_net_forward.1} parent=1 // pred_region
      _
    $region5: #{neural_net_forward.1} parent=1 // pred_fallthru
      _
    // Predicated region
    $region6: #{neural_net_forward.1} parent=1 // pred_check
      _
    $region7: #{neural_net_forward.1} parent=1 // pred_check_branch
      %15 = sbr.rel (0) target = $region9
    $region8: #{neural_net_forward.1} parent=1 // pred_region
      %s17 = ssub.s32 25088, 25088
      %18 = vsyncadd [#allocation3], %s17
      %s19 = sshll.u32 [#allocation2], 4
      %s20 = int_to_ptr.vmem [resolvable:$true] %s19
      %25 = dma.hbm_to_vmem [thread:$0]  %s1, 25088, %s20, [#allocation3], 256, 256, 16
    $region9: #{neural_net_forward.1} parent=1 // pred_fallthru
      _
    // Predicated region
    $region10: #{neural_net_forward.1} parent=1 // pred_check
      _
    $region11: #{neural_net_forward.1} parent=1 // pred_check_branch
      %27 = sbr.rel (0) target = $region13
    $region12: #{neural_net_forward.1} parent=1 // pred_region
      _
    $region13: #{neural_net_forward.1} parent=1 // pred_fallthru
      _
    // Predicated region
    $region14: #{neural_net_forward.1} parent=1 // pred_check
      _
    $region15: #{neural_net_forward.1} parent=1 // pred_check_branch
      %29 = sbr.rel (0) target = $region17
    $region16: #{neural_net_forward.1} parent=1 // pred_region
      %s31 = ssub.s32 4096, 4096
      %32 = vsyncadd [#allocation5], %s31
      %s33 = sshll.u32 [#allocation4], 4
      %s34 = int_to_ptr.vmem [resolvable:$true] %s33
      %39 = dma.hbm_to_vmem [thread:$0]  %s3, 4096, %s34, [#allocation5], 64, 64, 4
    $region17: #{neural_net_forward.1} parent=1 // pred_fallthru
      _
    // Predicated region
    $region18: #{neural_net_forward.1} parent=1 // pred_check
      _
    $region19: #{neural_net_forward.1} parent=1 // pred_check_branch
      %41 = sbr.rel (0) target = $region21
    $region20: #{neural_net_forward.1} parent=1 // pred_region
      _
    $region21: #{neural_net_forward.1} parent=1 // pred_fallthru
      _
    // Predicated region
    $region22: #{neural_net_forward.1} parent=1 // pred_check
      _
    $region23: #{neural_net_forward.1} parent=1 // pred_check_branch
      %43 = sbr.rel (0) target = $region25
    $region24: #{neural_net_forward.1} parent=1 // pred_region
      %44 = dma.done [#allocation3], 25088
    $region25: #{neural_net_forward.1} parent=1 // pred_fallthru
      _
    // Predicated region
    $region26: #{neural_net_forward.1} parent=1 // pred_check
      _
    $region27: #{neural_net_forward.1} parent=1 // pred_check_branch
      %46 = sbr.rel (0) target = $region29
    $region28: #{neural_net_forward.1} parent=1 // pred_region
      %47 = dma.done [#allocation5], 4096
    $region29: #{neural_net_forward.1} parent=1 // pred_fallthru
      _
    %v49 = vld [vmem:[%s0] sm:$0xff]
    %v50 = vld [vmem:[%s0 + $0x8] sm:$0xff]
    %v51 = vld [vmem:[%s0 + $0x10] sm:$0xff]
    %v52 = vld [vmem:[%s0 + $0x18] sm:$0xf]
    %v53 = vld [vmem:[%s0 + $0x1c] sm:$0xff]
    %v54 = vld [vmem:[%s0 + $0x24] sm:$0xff]
    %v55 = vld [vmem:[%s0 + $0x2c] sm:$0xff]
    %v56 = vld [vmem:[%s0 + $0x34] sm:$0xf]
    %v57 = vld [vmem:[#allocation2] sm:$0xff]
    %v58 = vld [vmem:[#allocation2 + $0x8] sm:$0xff]
    %v59 = vld [vmem:[#allocation2 + $0x10] sm:$0xff]
    %v60 = vld [vmem:[#allocation2 + $0x18] sm:$0xff]
    %v61 = vld [vmem:[#allocation2 + $0x20] sm:$0xff]
    %v62 = vld [vmem:[#allocation2 + $0x28] sm:$0xff]
    %v63 = vld [vmem:[#allocation2 + $0x30] sm:$0xff]
    %v64 = vld [vmem:[#allocation2 + $0x38] sm:$0xff]
    %v65 = vld [vmem:[#allocation2 + $0x40] sm:$0xff]
    %v66 = vld [vmem:[#allocation2 + $0x48] sm:$0xff]
    %v67 = vld [vmem:[#allocation2 + $0x50] sm:$0xff]
    %v68 = vld [vmem:[#allocation2 + $0x58] sm:$0xff]
    %v69 = vld [vmem:[#allocation2 + $0x60] sm:$0xff]
    %v70 = vld [vmem:[#allocation2 + $0x68] sm:$0xff]
    %v71 = vld [vmem:[#allocation2 + $0x70] sm:$0xff]
    %v72 = vld [vmem:[#allocation2 + $0x78] sm:$0xff]
    %v73 = vld [vmem:[#allocation2 + $0x80] sm:$0xff]
    %v74 = vld [vmem:[#allocation2 + $0x88] sm:$0xff]
    %v75 = vld [vmem:[#allocation2 + $0x90] sm:$0xff]
    %v76 = vld [vmem:[#allocation2 + $0x98] sm:$0xff]
    %v77 = vld [vmem:[#allocation2 + $0xa0] sm:$0xff]
    %v78 = vld [vmem:[#allocation2 + $0xa8] sm:$0xff]
    %v79 = vld [vmem:[#allocation2 + $0xb0] sm:$0xff]
    %v80 = vld [vmem:[#allocation2 + $0xb8] sm:$0xff]
    %v81 = vld [vmem:[#allocation2 + $0xc0] sm:$0xff]
    %v82 = vld [vmem:[#allocation2 + $0xc8] sm:$0xff]
    %v83 = vld [vmem:[#allocation2 + $0xd0] sm:$0xff]
    %v84 = vld [vmem:[#allocation2 + $0xd8] sm:$0xff]
    %v85 = vld [vmem:[#allocation2 + $0xe0] sm:$0xff]
    %v86 = vld [vmem:[#allocation2 + $0xe8] sm:$0xff]
    %v87 = vld [vmem:[#allocation2 + $0xf0] sm:$0xff]
    %v88 = vld [vmem:[#allocation2 + $0xf8] sm:$0xff]
    %v89 = vld [vmem:[#allocation2 + $0x100] sm:$0xff]
    %v90 = vld [vmem:[#allocation2 + $0x108] sm:$0xff]
    %v91 = vld [vmem:[#allocation2 + $0x110] sm:$0xff]
    %v92 = vld [vmem:[#allocation2 + $0x118] sm:$0xff]
    %v93 = vld [vmem:[#allocation2 + $0x120] sm:$0xff]
    %v94 = vld [vmem:[#allocation2 + $0x128] sm:$0xff]
    %v95 = vld [vmem:[#allocation2 + $0x130] sm:$0xff]
    %v96 = vld [vmem:[#allocation2 + $0x138] sm:$0xff]
    %v97 = vld [vmem:[#allocation2 + $0x140] sm:$0xff]
    %v98 = vld [vmem:[#allocation2 + $0x148] sm:$0xff]
    %v99 = vld [vmem:[#allocation2 + $0x150] sm:$0xff]
    %v100 = vld [vmem:[#allocation2 + $0x158] sm:$0xff]
    %v101 = vld [vmem:[#allocation2 + $0x160] sm:$0xff]
    %v102 = vld [vmem:[#allocation2 + $0x168] sm:$0xff]
    %v103 = vld [vmem:[#allocation2 + $0x170] sm:$0xff]
    %v104 = vld [vmem:[#allocation2 + $0x178] sm:$0xff]
    %v105 = vld [vmem:[#allocation2 + $0x180] sm:$0xff]
    %v106 = vld [vmem:[#allocation2 + $0x188] sm:$0xff]
    %v107 = vld [vmem:[#allocation2 + $0x190] sm:$0xff]
    %v108 = vld [vmem:[#allocation2 + $0x198] sm:$0xff]
    %v109 = vld [vmem:[#allocation2 + $0x1a0] sm:$0xff]
    %v110 = vld [vmem:[#allocation2 + $0x1a8] sm:$0xff]
    %v111 = vld [vmem:[#allocation2 + $0x1b0] sm:$0xff]
    %v112 = vld [vmem:[#allocation2 + $0x1b8] sm:$0xff]
    %v113 = vld [vmem:[#allocation2 + $0x1c0] sm:$0xff]
    %v114 = vld [vmem:[#allocation2 + $0x1c8] sm:$0xff]
    %v115 = vld [vmem:[#allocation2 + $0x1d0] sm:$0xff]
    %v116 = vld [vmem:[#allocation2 + $0x1d8] sm:$0xff]
    %v117 = vld [vmem:[#allocation2 + $0x1e0] sm:$0xff]
    %v118 = vld [vmem:[#allocation2 + $0x1e8] sm:$0xff]
    %v119 = vld [vmem:[#allocation2 + $0x1f0] sm:$0xff]
    %v120 = vld [vmem:[#allocation2 + $0x1f8] sm:$0xff]
    %v121 = vld [vmem:[#allocation2 + $0x200] sm:$0xff]
    %v122 = vld [vmem:[#allocation2 + $0x208] sm:$0xff]
    %v123 = vld [vmem:[#allocation2 + $0x210] sm:$0xff]
    %v124 = vld [vmem:[#allocation2 + $0x218] sm:$0xff]
    %v125 = vld [vmem:[#allocation2 + $0x220] sm:$0xff]
    %v126 = vld [vmem:[#allocation2 + $0x228] sm:$0xff]
    %v127 = vld [vmem:[#allocation2 + $0x230] sm:$0xff]
    %v128 = vld [vmem:[#allocation2 + $0x238] sm:$0xff]
    %v129 = vld [vmem:[#allocation2 + $0x240] sm:$0xff]
    %v130 = vld [vmem:[#allocation2 + $0x248] sm:$0xff]
    %v131 = vld [vmem:[#allocation2 + $0x250] sm:$0xff]
    %v132 = vld [vmem:[#allocation2 + $0x258] sm:$0xff]
    %v133 = vld [vmem:[#allocation2 + $0x260] sm:$0xff]
    %v134 = vld [vmem:[#allocation2 + $0x268] sm:$0xff]
    %v135 = vld [vmem:[#allocation2 + $0x270] sm:$0xff]
    %v136 = vld [vmem:[#allocation2 + $0x278] sm:$0xff]
    %v137 = vld [vmem:[#allocation2 + $0x280] sm:$0xff]
    %v138 = vld [vmem:[#allocation2 + $0x288] sm:$0xff]
    %v139 = vld [vmem:[#allocation2 + $0x290] sm:$0xff]
    %v140 = vld [vmem:[#allocation2 + $0x298] sm:$0xff]
    %v141 = vld [vmem:[#allocation2 + $0x2a0] sm:$0xff]
    %v142 = vld [vmem:[#allocation2 + $0x2a8] sm:$0xff]
    %v143 = vld [vmem:[#allocation2 + $0x2b0] sm:$0xff]
    %v144 = vld [vmem:[#allocation2 + $0x2b8] sm:$0xff]
    %v145 = vld [vmem:[#allocation2 + $0x2c0] sm:$0xff]
    %v146 = vld [vmem:[#allocation2 + $0x2c8] sm:$0xff]
    %v147 = vld [vmem:[#allocation2 + $0x2d0] sm:$0xff]
    %v148 = vld [vmem:[#allocation2 + $0x2d8] sm:$0xff]
    %v149 = vld [vmem:[#allocation2 + $0x2e0] sm:$0xff]
    %v150 = vld [vmem:[#allocation2 + $0x2e8] sm:$0xff]
    %v151 = vld [vmem:[#allocation2 + $0x2f0] sm:$0xff]
    %v152 = vld [vmem:[#allocation2 + $0x2f8] sm:$0xff]
    %v153 = vld [vmem:[#allocation2 + $0x300] sm:$0xff]
    %v154 = vld [vmem:[#allocation2 + $0x308] sm:$0xff]
    %v155 = vld [vmem:[#allocation2 + $0x310] sm:$0xff]
    %v156 = vld [vmem:[#allocation2 + $0x318] sm:$0xff]
    %v157 = vld [vmem:[#allocation2 + $0x320] sm:$0xff]
    %v158 = vld [vmem:[#allocation2 + $0x328] sm:$0xff]
    %v159 = vld [vmem:[#allocation2 + $0x330] sm:$0xff]
    %v160 = vld [vmem:[#allocation2 + $0x338] sm:$0xff]
    %v161 = vld [vmem:[#allocation2 + $0x340] sm:$0xff]
    %v162 = vld [vmem:[#allocation2 + $0x348] sm:$0xff]
    %v163 = vld [vmem:[#allocation2 + $0x350] sm:$0xff]
    %v164 = vld [vmem:[#allocation2 + $0x358] sm:$0xff]
    %v165 = vld [vmem:[#allocation2 + $0x360] sm:$0xff]
    %v166 = vld [vmem:[#allocation2 + $0x368] sm:$0xff]
    %v167 = vld [vmem:[#allocation2 + $0x370] sm:$0xff]
    %v168 = vld [vmem:[#allocation2 + $0x378] sm:$0xff]
    %v169 = vld [vmem:[#allocation2 + $0x380] sm:$0xff]
    %v170 = vld [vmem:[#allocation2 + $0x388] sm:$0xff]
    %v171 = vld [vmem:[#allocation2 + $0x390] sm:$0xff]
    %v172 = vld [vmem:[#allocation2 + $0x398] sm:$0xff]
    %v173 = vld [vmem:[#allocation2 + $0x3a0] sm:$0xff]
    %v174 = vld [vmem:[#allocation2 + $0x3a8] sm:$0xff]
    %v175 = vld [vmem:[#allocation2 + $0x3b0] sm:$0xff]
    %v176 = vld [vmem:[#allocation2 + $0x3b8] sm:$0xff]
    %v177 = vld [vmem:[#allocation2 + $0x3c0] sm:$0xff]
    %v178 = vld [vmem:[#allocation2 + $0x3c8] sm:$0xff]
    %v179 = vld [vmem:[#allocation2 + $0x3d0] sm:$0xff]
    %v180 = vld [vmem:[#allocation2 + $0x3d8] sm:$0xff]
    %v181 = vld [vmem:[#allocation2 + $0x3e0] sm:$0xff]
    %v182 = vld [vmem:[#allocation2 + $0x3e8] sm:$0xff]
    %v183 = vld [vmem:[#allocation2 + $0x3f0] sm:$0xff]
    %v184 = vld [vmem:[#allocation2 + $0x3f8] sm:$0xff]
    %v185 = vld [vmem:[#allocation2 + $0x400] sm:$0xff]
    %v186 = vld [vmem:[#allocation2 + $0x408] sm:$0xff]
    %v187 = vld [vmem:[#allocation2 + $0x410] sm:$0xff]
    %v188 = vld [vmem:[#allocation2 + $0x418] sm:$0xff]
    %v189 = vld [vmem:[#allocation2 + $0x420] sm:$0xff]
    %v190 = vld [vmem:[#allocation2 + $0x428] sm:$0xff]
    %v191 = vld [vmem:[#allocation2 + $0x430] sm:$0xff]
    %v192 = vld [vmem:[#allocation2 + $0x438] sm:$0xff]
    %v193 = vld [vmem:[#allocation2 + $0x440] sm:$0xff]
    %v194 = vld [vmem:[#allocation2 + $0x448] sm:$0xff]
    %v195 = vld [vmem:[#allocation2 + $0x450] sm:$0xff]
    %v196 = vld [vmem:[#allocation2 + $0x458] sm:$0xff]
    %v197 = vld [vmem:[#allocation2 + $0x460] sm:$0xff]
    %v198 = vld [vmem:[#allocation2 + $0x468] sm:$0xff]
    %v199 = vld [vmem:[#allocation2 + $0x470] sm:$0xff]
    %v200 = vld [vmem:[#allocation2 + $0x478] sm:$0xff]
    %v201 = vld [vmem:[#allocation2 + $0x480] sm:$0xff]
    %v202 = vld [vmem:[#allocation2 + $0x488] sm:$0xff]
    %v203 = vld [vmem:[#allocation2 + $0x490] sm:$0xff]
    %v204 = vld [vmem:[#allocation2 + $0x498] sm:$0xff]
    %v205 = vld [vmem:[#allocation2 + $0x4a0] sm:$0xff]
    %v206 = vld [vmem:[#allocation2 + $0x4a8] sm:$0xff]
    %v207 = vld [vmem:[#allocation2 + $0x4b0] sm:$0xff]
    %v208 = vld [vmem:[#allocation2 + $0x4b8] sm:$0xff]
    %v209 = vld [vmem:[#allocation2 + $0x4c0] sm:$0xff]
    %v210 = vld [vmem:[#allocation2 + $0x4c8] sm:$0xff]
    %v211 = vld [vmem:[#allocation2 + $0x4d0] sm:$0xff]
    %v212 = vld [vmem:[#allocation2 + $0x4d8] sm:$0xff]
    %v213 = vld [vmem:[#allocation2 + $0x4e0] sm:$0xff]
    %v214 = vld [vmem:[#allocation2 + $0x4e8] sm:$0xff]
    %v215 = vld [vmem:[#allocation2 + $0x4f0] sm:$0xff]
    %v216 = vld [vmem:[#allocation2 + $0x4f8] sm:$0xff]
    %v217 = vld [vmem:[#allocation2 + $0x500] sm:$0xff]
    %v218 = vld [vmem:[#allocation2 + $0x508] sm:$0xff]
    %v219 = vld [vmem:[#allocation2 + $0x510] sm:$0xff]
    %v220 = vld [vmem:[#allocation2 + $0x518] sm:$0xff]
    %v221 = vld [vmem:[#allocation2 + $0x520] sm:$0xff]
    %v222 = vld [vmem:[#allocation2 + $0x528] sm:$0xff]
    %v223 = vld [vmem:[#allocation2 + $0x530] sm:$0xff]
    %v224 = vld [vmem:[#allocation2 + $0x538] sm:$0xff]
    %v225 = vld [vmem:[#allocation2 + $0x540] sm:$0xff]
    %v226 = vld [vmem:[#allocation2 + $0x548] sm:$0xff]
    %v227 = vld [vmem:[#allocation2 + $0x550] sm:$0xff]
    %v228 = vld [vmem:[#allocation2 + $0x558] sm:$0xff]
    %v229 = vld [vmem:[#allocation2 + $0x560] sm:$0xff]
    %v230 = vld [vmem:[#allocation2 + $0x568] sm:$0xff]
    %v231 = vld [vmem:[#allocation2 + $0x570] sm:$0xff]
    %v232 = vld [vmem:[#allocation2 + $0x578] sm:$0xff]
    %v233 = vld [vmem:[#allocation2 + $0x580] sm:$0xff]
    %v234 = vld [vmem:[#allocation2 + $0x588] sm:$0xff]
    %v235 = vld [vmem:[#allocation2 + $0x590] sm:$0xff]
    %v236 = vld [vmem:[#allocation2 + $0x598] sm:$0xff]
    %v237 = vld [vmem:[#allocation2 + $0x5a0] sm:$0xff]
    %v238 = vld [vmem:[#allocation2 + $0x5a8] sm:$0xff]
    %v239 = vld [vmem:[#allocation2 + $0x5b0] sm:$0xff]
    %v240 = vld [vmem:[#allocation2 + $0x5b8] sm:$0xff]
    %v241 = vld [vmem:[#allocation2 + $0x5c0] sm:$0xff]
    %v242 = vld [vmem:[#allocation2 + $0x5c8] sm:$0xff]
    %v243 = vld [vmem:[#allocation2 + $0x5d0] sm:$0xff]
    %v244 = vld [vmem:[#allocation2 + $0x5d8] sm:$0xff]
    %v245 = vld [vmem:[#allocation2 + $0x5e0] sm:$0xff]
    %v246 = vld [vmem:[#allocation2 + $0x5e8] sm:$0xff]
    %v247 = vld [vmem:[#allocation2 + $0x5f0] sm:$0xff]
    %v248 = vld [vmem:[#allocation2 + $0x5f8] sm:$0xff]
    %v249 = vld [vmem:[#allocation2 + $0x600] sm:$0xff]
    %v250 = vld [vmem:[#allocation2 + $0x608] sm:$0xff]
    %v251 = vld [vmem:[#allocation2 + $0x610] sm:$0xff]
    %v252 = vld [vmem:[#allocation2 + $0x618] sm:$0xff]
    %v253 = vld [vmem:[%s2] sm:$0xf]
    %v255 = vlaneseq
    %v256 = vshrl.u32 %v255, 7
    %v257 = vsub.s32 0, %v256
    %v258 = vrot.slane %v253, %v257
    %v259 = vlaneseq
    %v260 = vshrl.u32 %v259, 7
    %v261 = vsub.s32 1, %v260
    %v262 = vrot.slane %v253, %v261
    %v263 = vlaneseq
    %v264 = vshrl.u32 %v263, 7
    %v265 = vsub.s32 2, %v264
    %v266 = vrot.slane %v253, %v265
    %v267 = vlaneseq
    %v268 = vshrl.u32 %v267, 7
    %v269 = vsub.s32 3, %v268
    %v270 = vrot.slane %v253, %v269
    %v283 = vunpack.c.l.b16 %v49
    %v284 = vunpack.c.h.b16 %v49
    %v285 = vunpack.c.l.b16 %v50
    %v286 = vunpack.c.h.b16 %v50
    %v287 = vunpack.c.l.b16 %v51
    %v288 = vunpack.c.h.b16 %v51
    %v289 = vunpack.c.l.b16 %v52
    %v290 = vunpack.c.l.b16 %v53
    %v291 = vunpack.c.h.b16 %v53
    %v292 = vunpack.c.l.b16 %v54
    %v293 = vunpack.c.h.b16 %v54
    %v294 = vunpack.c.l.b16 %v55
    %v295 = vunpack.c.h.b16 %v55
    %v296 = vunpack.c.l.b16 %v56
    %v297 = vpack.c.b16 %v290, %v283
    %v298 = vpack.c.b16 %v291, %v284
    %v299 = vpack.c.b16 %v292, %v285
    %v300 = vpack.c.b16 %v293, %v286
    %v301 = vpack.c.b16 %v294, %v287
    %v302 = vpack.c.b16 %v295, %v288
    %v303 = vpack.c.b16 %v296, %v289
    %v506 = vunpack.c.l.b16 %v57
    %v507 = vunpack.c.h.b16 %v57
    %v508 = vunpack.c.l.b16 %v58
    %v509 = vunpack.c.h.b16 %v58
    %v510 = vunpack.c.l.b16 %v59
    %v511 = vunpack.c.h.b16 %v59
    %v512 = vunpack.c.l.b16 %v60
    %v513 = vunpack.c.h.b16 %v60
    %v514 = vunpack.c.l.b16 %v61
    %v515 = vunpack.c.h.b16 %v61
    %v516 = vunpack.c.l.b16 %v62
    %v517 = vunpack.c.h.b16 %v62
    %v518 = vunpack.c.l.b16 %v63
    %v519 = vunpack.c.h.b16 %v63
    %v520 = vunpack.c.l.b16 %v64
    %v521 = vunpack.c.h.b16 %v64
    %v522 = vunpack.c.l.b16 %v65
    %v523 = vunpack.c.h.b16 %v65
    %v524 = vunpack.c.l.b16 %v66
    %v525 = vunpack.c.h.b16 %v66
    %v526 = vunpack.c.l.b16 %v67
    %v527 = vunpack.c.h.b16 %v67
    %v528 = vunpack.c.l.b16 %v68
    %v529 = vunpack.c.h.b16 %v68
    %v530 = vunpack.c.l.b16 %v69
    %v531 = vunpack.c.h.b16 %v69
    %v532 = vunpack.c.l.b16 %v70
    %v533 = vunpack.c.h.b16 %v70
    %v534 = vunpack.c.l.b16 %v71
    %v535 = vunpack.c.h.b16 %v71
    %v536 = vunpack.c.l.b16 %v72
    %v537 = vunpack.c.h.b16 %v72
    %v538 = vunpack.c.l.b16 %v73
    %v539 = vunpack.c.h.b16 %v73
    %v540 = vunpack.c.l.b16 %v74
    %v541 = vunpack.c.h.b16 %v74
    %v542 = vunpack.c.l.b16 %v75
    %v543 = vunpack.c.h.b16 %v75
    %v544 = vunpack.c.l.b16 %v76
    %v545 = vunpack.c.h.b16 %v76
    %v546 = vunpack.c.l.b16 %v77
    %v547 = vunpack.c.h.b16 %v77
    %v548 = vunpack.c.l.b16 %v78
    %v549 = vunpack.c.h.b16 %v78
    %v550 = vunpack.c.l.b16 %v79
    %v551 = vunpack.c.h.b16 %v79
    %v552 = vunpack.c.l.b16 %v80
    %v553 = vunpack.c.h.b16 %v80
    %v554 = vunpack.c.l.b16 %v81
    %v555 = vunpack.c.h.b16 %v81
    %v556 = vunpack.c.l.b16 %v82
    %v557 = vunpack.c.h.b16 %v82
    %v558 = vunpack.c.l.b16 %v83
    %v559 = vunpack.c.h.b16 %v83
    %v560 = vunpack.c.l.b16 %v84
    %v561 = vunpack.c.h.b16 %v84
    %v562 = vunpack.c.l.b16 %v85
    %v563 = vunpack.c.h.b16 %v85
    %v564 = vunpack.c.l.b16 %v86
    %v565 = vunpack.c.h.b16 %v86
    %v566 = vunpack.c.l.b16 %v87
    %v567 = vunpack.c.h.b16 %v87
    %v568 = vunpack.c.l.b16 %v88
    %v569 = vunpack.c.h.b16 %v88
    %v570 = vunpack.c.l.b16 %v89
    %v571 = vunpack.c.h.b16 %v89
    %v572 = vunpack.c.l.b16 %v90
    %v573 = vunpack.c.h.b16 %v90
    %v574 = vunpack.c.l.b16 %v91
    %v575 = vunpack.c.h.b16 %v91
    %v576 = vunpack.c.l.b16 %v92
    %v577 = vunpack.c.h.b16 %v92
    %v578 = vunpack.c.l.b16 %v93
    %v579 = vunpack.c.h.b16 %v93
    %v580 = vunpack.c.l.b16 %v94
    %v581 = vunpack.c.h.b16 %v94
    %v582 = vunpack.c.l.b16 %v95
    %v583 = vunpack.c.h.b16 %v95
    %v584 = vunpack.c.l.b16 %v96
    %v585 = vunpack.c.h.b16 %v96
    %v586 = vunpack.c.l.b16 %v97
    %v587 = vunpack.c.h.b16 %v97
    %v588 = vunpack.c.l.b16 %v98
    %v589 = vunpack.c.h.b16 %v98
    %v590 = vunpack.c.l.b16 %v99
    %v591 = vunpack.c.h.b16 %v99
    %v592 = vunpack.c.l.b16 %v100
    %v593 = vunpack.c.h.b16 %v100
    %v594 = vunpack.c.l.b16 %v101
    %v595 = vunpack.c.h.b16 %v101
    %v596 = vunpack.c.l.b16 %v102
    %v597 = vunpack.c.h.b16 %v102
    %v598 = vunpack.c.l.b16 %v103
    %v599 = vunpack.c.h.b16 %v103
    %v600 = vunpack.c.l.b16 %v104
    %v601 = vunpack.c.h.b16 %v104
    %v602 = vunpack.c.l.b16 %v105
    %v603 = vunpack.c.h.b16 %v105
    %v604 = vunpack.c.l.b16 %v106
    %v605 = vunpack.c.h.b16 %v106
    %v606 = vunpack.c.l.b16 %v107
    %v607 = vunpack.c.h.b16 %v107
    %v608 = vunpack.c.l.b16 %v108
    %v609 = vunpack.c.h.b16 %v108
    %v610 = vunpack.c.l.b16 %v109
    %v611 = vunpack.c.h.b16 %v109
    %v612 = vunpack.c.l.b16 %v110
    %v613 = vunpack.c.h.b16 %v110
    %v614 = vunpack.c.l.b16 %v111
    %v615 = vunpack.c.h.b16 %v111
    %v616 = vunpack.c.l.b16 %v112
    %v617 = vunpack.c.h.b16 %v112
    %v618 = vunpack.c.l.b16 %v113
    %v619 = vunpack.c.h.b16 %v113
    %v620 = vunpack.c.l.b16 %v114
    %v621 = vunpack.c.h.b16 %v114
    %v622 = vunpack.c.l.b16 %v115
    %v623 = vunpack.c.h.b16 %v115
    %v624 = vunpack.c.l.b16 %v116
    %v625 = vunpack.c.h.b16 %v116
    %v626 = vunpack.c.l.b16 %v117
    %v627 = vunpack.c.h.b16 %v117
    %v628 = vunpack.c.l.b16 %v118
    %v629 = vunpack.c.h.b16 %v118
    %v630 = vunpack.c.l.b16 %v119
    %v631 = vunpack.c.h.b16 %v119
    %v632 = vunpack.c.l.b16 %v120
    %v633 = vunpack.c.h.b16 %v120
    %v634 = vunpack.c.l.b16 %v121
    %v635 = vunpack.c.h.b16 %v121
    %v636 = vunpack.c.l.b16 %v122
    %v637 = vunpack.c.h.b16 %v122
    %v638 = vunpack.c.l.b16 %v123
    %v639 = vunpack.c.h.b16 %v123
    %v640 = vunpack.c.l.b16 %v124
    %v641 = vunpack.c.h.b16 %v124
    %v642 = vunpack.c.l.b16 %v125
    %v643 = vunpack.c.h.b16 %v125
    %v644 = vunpack.c.l.b16 %v126
    %v645 = vunpack.c.h.b16 %v126
    %v646 = vunpack.c.l.b16 %v127
    %v647 = vunpack.c.h.b16 %v127
    %v648 = vunpack.c.l.b16 %v128
    %v649 = vunpack.c.h.b16 %v128
    %v650 = vunpack.c.l.b16 %v129
    %v651 = vunpack.c.h.b16 %v129
    %v652 = vunpack.c.l.b16 %v130
    %v653 = vunpack.c.h.b16 %v130
    %v654 = vunpack.c.l.b16 %v131
    %v655 = vunpack.c.h.b16 %v131
    %v656 = vunpack.c.l.b16 %v132
    %v657 = vunpack.c.h.b16 %v132
    %v658 = vunpack.c.l.b16 %v133
    %v659 = vunpack.c.h.b16 %v133
    %v660 = vunpack.c.l.b16 %v134
    %v661 = vunpack.c.h.b16 %v134
    %v662 = vunpack.c.l.b16 %v135
    %v663 = vunpack.c.h.b16 %v135
    %v664 = vunpack.c.l.b16 %v136
    %v665 = vunpack.c.h.b16 %v136
    %v666 = vunpack.c.l.b16 %v137
    %v667 = vunpack.c.h.b16 %v137
    %v668 = vunpack.c.l.b16 %v138
    %v669 = vunpack.c.h.b16 %v138
    %v670 = vunpack.c.l.b16 %v139
    %v671 = vunpack.c.h.b16 %v139
    %v672 = vunpack.c.l.b16 %v140
    %v673 = vunpack.c.h.b16 %v140
    %v674 = vunpack.c.l.b16 %v141
    %v675 = vunpack.c.h.b16 %v141
    %v676 = vunpack.c.l.b16 %v142
    %v677 = vunpack.c.h.b16 %v142
    %v678 = vunpack.c.l.b16 %v143
    %v679 = vunpack.c.h.b16 %v143
    %v680 = vunpack.c.l.b16 %v144
    %v681 = vunpack.c.h.b16 %v144
    %v682 = vunpack.c.l.b16 %v145
    %v683 = vunpack.c.h.b16 %v145
    %v684 = vunpack.c.l.b16 %v146
    %v685 = vunpack.c.h.b16 %v146
    %v686 = vunpack.c.l.b16 %v147
    %v687 = vunpack.c.h.b16 %v147
    %v688 = vunpack.c.l.b16 %v148
    %v689 = vunpack.c.h.b16 %v148
    %v690 = vunpack.c.l.b16 %v149
    %v691 = vunpack.c.h.b16 %v149
    %v692 = vunpack.c.l.b16 %v150
    %v693 = vunpack.c.h.b16 %v150
    %v694 = vunpack.c.l.b16 %v151
    %v695 = vunpack.c.h.b16 %v151
    %v696 = vunpack.c.l.b16 %v152
    %v697 = vunpack.c.h.b16 %v152
    %v698 = vunpack.c.l.b16 %v153
    %v699 = vunpack.c.h.b16 %v153
    %v700 = vunpack.c.l.b16 %v154
    %v701 = vunpack.c.h.b16 %v154
    %v702 = vunpack.c.l.b16 %v155
    %v703 = vunpack.c.h.b16 %v155
    %v704 = vunpack.c.l.b16 %v156
    %v705 = vunpack.c.h.b16 %v156
    %v706 = vunpack.c.l.b16 %v157
    %v707 = vunpack.c.h.b16 %v157
    %v708 = vunpack.c.l.b16 %v158
    %v709 = vunpack.c.h.b16 %v158
    %v710 = vunpack.c.l.b16 %v159
    %v711 = vunpack.c.h.b16 %v159
    %v712 = vunpack.c.l.b16 %v160
    %v713 = vunpack.c.h.b16 %v160
    %v714 = vunpack.c.l.b16 %v161
    %v715 = vunpack.c.h.b16 %v161
    %v716 = vunpack.c.l.b16 %v162
    %v717 = vunpack.c.h.b16 %v162
    %v718 = vunpack.c.l.b16 %v163
    %v719 = vunpack.c.h.b16 %v163
    %v720 = vunpack.c.l.b16 %v164
    %v721 = vunpack.c.h.b16 %v164
    %v722 = vunpack.c.l.b16 %v165
    %v723 = vunpack.c.h.b16 %v165
    %v724 = vunpack.c.l.b16 %v166
    %v725 = vunpack.c.h.b16 %v166
    %v726 = vunpack.c.l.b16 %v167
    %v727 = vunpack.c.h.b16 %v167
    %v728 = vunpack.c.l.b16 %v168
    %v729 = vunpack.c.h.b16 %v168
    %v730 = vunpack.c.l.b16 %v169
    %v731 = vunpack.c.h.b16 %v169
    %v732 = vunpack.c.l.b16 %v170
    %v733 = vunpack.c.h.b16 %v170
    %v734 = vunpack.c.l.b16 %v171
    %v735 = vunpack.c.h.b16 %v171
    %v736 = vunpack.c.l.b16 %v172
    %v737 = vunpack.c.h.b16 %v172
    %v738 = vunpack.c.l.b16 %v173
    %v739 = vunpack.c.h.b16 %v173
    %v740 = vunpack.c.l.b16 %v174
    %v741 = vunpack.c.h.b16 %v174
    %v742 = vunpack.c.l.b16 %v175
    %v743 = vunpack.c.h.b16 %v175
    %v744 = vunpack.c.l.b16 %v176
    %v745 = vunpack.c.h.b16 %v176
    %v746 = vunpack.c.l.b16 %v177
    %v747 = vunpack.c.h.b16 %v177
    %v748 = vunpack.c.l.b16 %v178
    %v749 = vunpack.c.h.b16 %v178
    %v750 = vunpack.c.l.b16 %v179
    %v751 = vunpack.c.h.b16 %v179
    %v752 = vunpack.c.l.b16 %v180
    %v753 = vunpack.c.h.b16 %v180
    %v754 = vunpack.c.l.b16 %v181
    %v755 = vunpack.c.h.b16 %v181
    %v756 = vunpack.c.l.b16 %v182
    %v757 = vunpack.c.h.b16 %v182
    %v758 = vunpack.c.l.b16 %v183
    %v759 = vunpack.c.h.b16 %v183
    %v760 = vunpack.c.l.b16 %v184
    %v761 = vunpack.c.h.b16 %v184
    %v762 = vunpack.c.l.b16 %v185
    %v763 = vunpack.c.h.b16 %v185
    %v764 = vunpack.c.l.b16 %v186
    %v765 = vunpack.c.h.b16 %v186
    %v766 = vunpack.c.l.b16 %v187
    %v767 = vunpack.c.h.b16 %v187
    %v768 = vunpack.c.l.b16 %v188
    %v769 = vunpack.c.h.b16 %v188
    %v770 = vunpack.c.l.b16 %v189
    %v771 = vunpack.c.h.b16 %v189
    %v772 = vunpack.c.l.b16 %v190
    %v773 = vunpack.c.h.b16 %v190
    %v774 = vunpack.c.l.b16 %v191
    %v775 = vunpack.c.h.b16 %v191
    %v776 = vunpack.c.l.b16 %v192
    %v777 = vunpack.c.h.b16 %v192
    %v778 = vunpack.c.l.b16 %v193
    %v779 = vunpack.c.h.b16 %v193
    %v780 = vunpack.c.l.b16 %v194
    %v781 = vunpack.c.h.b16 %v194
    %v782 = vunpack.c.l.b16 %v195
    %v783 = vunpack.c.h.b16 %v195
    %v784 = vunpack.c.l.b16 %v196
    %v785 = vunpack.c.h.b16 %v196
    %v786 = vunpack.c.l.b16 %v197
    %v787 = vunpack.c.h.b16 %v197
    %v788 = vunpack.c.l.b16 %v198
    %v789 = vunpack.c.h.b16 %v198
    %v790 = vunpack.c.l.b16 %v199
    %v791 = vunpack.c.h.b16 %v199
    %v792 = vunpack.c.l.b16 %v200
    %v793 = vunpack.c.h.b16 %v200
    %v794 = vunpack.c.l.b16 %v201
    %v795 = vunpack.c.h.b16 %v201
    %v796 = vunpack.c.l.b16 %v202
    %v797 = vunpack.c.h.b16 %v202
    %v798 = vunpack.c.l.b16 %v203
    %v799 = vunpack.c.h.b16 %v203
    %v800 = vunpack.c.l.b16 %v204
    %v801 = vunpack.c.h.b16 %v204
    %v802 = vunpack.c.l.b16 %v205
    %v803 = vunpack.c.h.b16 %v205
    %v804 = vunpack.c.l.b16 %v206
    %v805 = vunpack.c.h.b16 %v206
    %v806 = vunpack.c.l.b16 %v207
    %v807 = vunpack.c.h.b16 %v207
    %v808 = vunpack.c.l.b16 %v208
    %v809 = vunpack.c.h.b16 %v208
    %v810 = vunpack.c.l.b16 %v209
    %v811 = vunpack.c.h.b16 %v209
    %v812 = vunpack.c.l.b16 %v210
    %v813 = vunpack.c.h.b16 %v210
    %v814 = vunpack.c.l.b16 %v211
    %v815 = vunpack.c.h.b16 %v211
    %v816 = vunpack.c.l.b16 %v212
    %v817 = vunpack.c.h.b16 %v212
    %v818 = vunpack.c.l.b16 %v213
    %v819 = vunpack.c.h.b16 %v213
    %v820 = vunpack.c.l.b16 %v214
    %v821 = vunpack.c.h.b16 %v214
    %v822 = vunpack.c.l.b16 %v215
    %v823 = vunpack.c.h.b16 %v215
    %v824 = vunpack.c.l.b16 %v216
    %v825 = vunpack.c.h.b16 %v216
    %v826 = vunpack.c.l.b16 %v217
    %v827 = vunpack.c.h.b16 %v217
    %v828 = vunpack.c.l.b16 %v218
    %v829 = vunpack.c.h.b16 %v218
    %v830 = vunpack.c.l.b16 %v219
    %v831 = vunpack.c.h.b16 %v219
    %v832 = vunpack.c.l.b16 %v220
    %v833 = vunpack.c.h.b16 %v220
    %v834 = vunpack.c.l.b16 %v221
    %v835 = vunpack.c.h.b16 %v221
    %v836 = vunpack.c.l.b16 %v222
    %v837 = vunpack.c.h.b16 %v222
    %v838 = vunpack.c.l.b16 %v223
    %v839 = vunpack.c.h.b16 %v223
    %v840 = vunpack.c.l.b16 %v224
    %v841 = vunpack.c.h.b16 %v224
    %v842 = vunpack.c.l.b16 %v225
    %v843 = vunpack.c.h.b16 %v225
    %v844 = vunpack.c.l.b16 %v226
    %v845 = vunpack.c.h.b16 %v226
    %v846 = vunpack.c.l.b16 %v227
    %v847 = vunpack.c.h.b16 %v227
    %v848 = vunpack.c.l.b16 %v228
    %v849 = vunpack.c.h.b16 %v228
    %v850 = vunpack.c.l.b16 %v229
    %v851 = vunpack.c.h.b16 %v229
    %v852 = vunpack.c.l.b16 %v230
    %v853 = vunpack.c.h.b16 %v230
    %v854 = vunpack.c.l.b16 %v231
    %v855 = vunpack.c.h.b16 %v231
    %v856 = vunpack.c.l.b16 %v232
    %v857 = vunpack.c.h.b16 %v232
    %v858 = vunpack.c.l.b16 %v233
    %v859 = vunpack.c.h.b16 %v233
    %v860 = vunpack.c.l.b16 %v234
    %v861 = vunpack.c.h.b16 %v234
    %v862 = vunpack.c.l.b16 %v235
    %v863 = vunpack.c.h.b16 %v235
    %v864 = vunpack.c.l.b16 %v236
    %v865 = vunpack.c.h.b16 %v236
    %v866 = vunpack.c.l.b16 %v237
    %v867 = vunpack.c.h.b16 %v237
    %v868 = vunpack.c.l.b16 %v238
    %v869 = vunpack.c.h.b16 %v238
    %v870 = vunpack.c.l.b16 %v239
    %v871 = vunpack.c.h.b16 %v239
    %v872 = vunpack.c.l.b16 %v240
    %v873 = vunpack.c.h.b16 %v240
    %v874 = vunpack.c.l.b16 %v241
    %v875 = vunpack.c.h.b16 %v241
    %v876 = vunpack.c.l.b16 %v242
    %v877 = vunpack.c.h.b16 %v242
    %v878 = vunpack.c.l.b16 %v243
    %v879 = vunpack.c.h.b16 %v243
    %v880 = vunpack.c.l.b16 %v244
    %v881 = vunpack.c.h.b16 %v244
    %v882 = vunpack.c.l.b16 %v245
    %v883 = vunpack.c.h.b16 %v245
    %v884 = vunpack.c.l.b16 %v246
    %v885 = vunpack.c.h.b16 %v246
    %v886 = vunpack.c.l.b16 %v247
    %v887 = vunpack.c.h.b16 %v247
    %v888 = vunpack.c.l.b16 %v248
    %v889 = vunpack.c.h.b16 %v248
    %v890 = vunpack.c.l.b16 %v249
    %v891 = vunpack.c.h.b16 %v249
    %v892 = vunpack.c.l.b16 %v250
    %v893 = vunpack.c.h.b16 %v250
    %v894 = vunpack.c.l.b16 %v251
    %v895 = vunpack.c.h.b16 %v251
    %v896 = vunpack.c.l.b16 %v252
    %v897 = vunpack.c.h.b16 %v252
    %v898 = vpack.c.b16 %v510, %v506
    %v899 = vpack.c.b16 %v511, %v507
    %v900 = vpack.c.b16 %v512, %v508
    %v901 = vpack.c.b16 %v513, %v509
    %v902 = vpack.c.b16 %v518, %v514
    %v903 = vpack.c.b16 %v519, %v515
    %v904 = vpack.c.b16 %v520, %v516
    %v905 = vpack.c.b16 %v521, %v517
    %v906 = vpack.c.b16 %v526, %v522
    %v907 = vpack.c.b16 %v527, %v523
    %v908 = vpack.c.b16 %v528, %v524
    %v909 = vpack.c.b16 %v529, %v525
    %v910 = vpack.c.b16 %v534, %v530
    %v911 = vpack.c.b16 %v535, %v531
    %v912 = vpack.c.b16 %v536, %v532
    %v913 = vpack.c.b16 %v537, %v533
    %v914 = vpack.c.b16 %v542, %v538
    %v915 = vpack.c.b16 %v543, %v539
    %v916 = vpack.c.b16 %v544, %v540
    %v917 = vpack.c.b16 %v545, %v541
    %v918 = vpack.c.b16 %v550, %v546
    %v919 = vpack.c.b16 %v551, %v547
    %v920 = vpack.c.b16 %v552, %v548
    %v921 = vpack.c.b16 %v553, %v549
    %v922 = vpack.c.b16 %v558, %v554
    %v923 = vpack.c.b16 %v559, %v555
    %v924 = vpack.c.b16 %v560, %v556
    %v925 = vpack.c.b16 %v561, %v557
    %v926 = vpack.c.b16 %v566, %v562
    %v927 = vpack.c.b16 %v567, %v563
    %v928 = vpack.c.b16 %v568, %v564
    %v929 = vpack.c.b16 %v569, %v565
    %v930 = vpack.c.b16 %v574, %v570
    %v931 = vpack.c.b16 %v575, %v571
    %v932 = vpack.c.b16 %v576, %v572
    %v933 = vpack.c.b16 %v577, %v573
    %v934 = vpack.c.b16 %v582, %v578
    %v935 = vpack.c.b16 %v583, %v579
    %v936 = vpack.c.b16 %v584, %v580
    %v937 = vpack.c.b16 %v585, %v581
    %v938 = vpack.c.b16 %v590, %v586
    %v939 = vpack.c.b16 %v591, %v587
    %v940 = vpack.c.b16 %v592, %v588
    %v941 = vpack.c.b16 %v593, %v589
    %v942 = vpack.c.b16 %v598, %v594
    %v943 = vpack.c.b16 %v599, %v595
    %v944 = vpack.c.b16 %v600, %v596
    %v945 = vpack.c.b16 %v601, %v597
    %v946 = vpack.c.b16 %v606, %v602
    %v947 = vpack.c.b16 %v607, %v603
    %v948 = vpack.c.b16 %v608, %v604
    %v949 = vpack.c.b16 %v609, %v605
    %v950 = vpack.c.b16 %v614, %v610
    %v951 = vpack.c.b16 %v615, %v611
    %v952 = vpack.c.b16 %v616, %v612
    %v953 = vpack.c.b16 %v617, %v613
    %v954 = vpack.c.b16 %v622, %v618
    %v955 = vpack.c.b16 %v623, %v619
    %v956 = vpack.c.b16 %v624, %v620
    %v957 = vpack.c.b16 %v625, %v621
    %v958 = vpack.c.b16 %v630, %v626
    %v959 = vpack.c.b16 %v631, %v627
    %v960 = vpack.c.b16 %v632, %v628
    %v961 = vpack.c.b16 %v633, %v629
    %v962 = vpack.c.b16 %v638, %v634
    %v963 = vpack.c.b16 %v639, %v635
    %v964 = vpack.c.b16 %v640, %v636
    %v965 = vpack.c.b16 %v641, %v637
    %v966 = vpack.c.b16 %v646, %v642
    %v967 = vpack.c.b16 %v647, %v643
    %v968 = vpack.c.b16 %v648, %v644
    %v969 = vpack.c.b16 %v649, %v645
    %v970 = vpack.c.b16 %v654, %v650
    %v971 = vpack.c.b16 %v655, %v651
    %v972 = vpack.c.b16 %v656, %v652
    %v973 = vpack.c.b16 %v657, %v653
    %v974 = vpack.c.b16 %v662, %v658
    %v975 = vpack.c.b16 %v663, %v659
    %v976 = vpack.c.b16 %v664, %v660
    %v977 = vpack.c.b16 %v665, %v661
    %v978 = vpack.c.b16 %v670, %v666
    %v979 = vpack.c.b16 %v671, %v667
    %v980 = vpack.c.b16 %v672, %v668
    %v981 = vpack.c.b16 %v673, %v669
    %v982 = vpack.c.b16 %v678, %v674
    %v983 = vpack.c.b16 %v679, %v675
    %v984 = vpack.c.b16 %v680, %v676
    %v985 = vpack.c.b16 %v681, %v677
    %v986 = vpack.c.b16 %v686, %v682
    %v987 = vpack.c.b16 %v687, %v683
    %v988 = vpack.c.b16 %v688, %v684
    %v989 = vpack.c.b16 %v689, %v685
    %v990 = vpack.c.b16 %v694, %v690
    %v991 = vpack.c.b16 %v695, %v691
    %v992 = vpack.c.b16 %v696, %v692
    %v993 = vpack.c.b16 %v697, %v693
    %v994 = vpack.c.b16 %v702, %v698
    %v995 = vpack.c.b16 %v703, %v699
    %v996 = vpack.c.b16 %v704, %v700
    %v997 = vpack.c.b16 %v705, %v701
    %v998 = vpack.c.b16 %v710, %v706
    %v999 = vpack.c.b16 %v711, %v707
    %v1000 = vpack.c.b16 %v712, %v708
    %v1001 = vpack.c.b16 %v713, %v709
    %v1002 = vpack.c.b16 %v718, %v714
    %v1003 = vpack.c.b16 %v719, %v715
    %v1004 = vpack.c.b16 %v720, %v716
    %v1005 = vpack.c.b16 %v721, %v717
    %v1006 = vpack.c.b16 %v726, %v722
    %v1007 = vpack.c.b16 %v727, %v723
    %v1008 = vpack.c.b16 %v728, %v724
    %v1009 = vpack.c.b16 %v729, %v725
    %v1010 = vpack.c.b16 %v734, %v730
    %v1011 = vpack.c.b16 %v735, %v731
    %v1012 = vpack.c.b16 %v736, %v732
    %v1013 = vpack.c.b16 %v737, %v733
    %v1014 = vpack.c.b16 %v742, %v738
    %v1015 = vpack.c.b16 %v743, %v739
    %v1016 = vpack.c.b16 %v744, %v740
    %v1017 = vpack.c.b16 %v745, %v741
    %v1018 = vpack.c.b16 %v750, %v746
    %v1019 = vpack.c.b16 %v751, %v747
    %v1020 = vpack.c.b16 %v752, %v748
    %v1021 = vpack.c.b16 %v753, %v749
    %v1022 = vpack.c.b16 %v758, %v754
    %v1023 = vpack.c.b16 %v759, %v755
    %v1024 = vpack.c.b16 %v760, %v756
    %v1025 = vpack.c.b16 %v761, %v757
    %v1026 = vpack.c.b16 %v766, %v762
    %v1027 = vpack.c.b16 %v767, %v763
    %v1028 = vpack.c.b16 %v768, %v764
    %v1029 = vpack.c.b16 %v769, %v765
    %v1030 = vpack.c.b16 %v774, %v770
    %v1031 = vpack.c.b16 %v775, %v771
    %v1032 = vpack.c.b16 %v776, %v772
    %v1033 = vpack.c.b16 %v777, %v773
    %v1034 = vpack.c.b16 %v782, %v778
    %v1035 = vpack.c.b16 %v783, %v779
    %v1036 = vpack.c.b16 %v784, %v780
    %v1037 = vpack.c.b16 %v785, %v781
    %v1038 = vpack.c.b16 %v790, %v786
    %v1039 = vpack.c.b16 %v791, %v787
    %v1040 = vpack.c.b16 %v792, %v788
    %v1041 = vpack.c.b16 %v793, %v789
    %v1042 = vpack.c.b16 %v798, %v794
    %v1043 = vpack.c.b16 %v799, %v795
    %v1044 = vpack.c.b16 %v800, %v796
    %v1045 = vpack.c.b16 %v801, %v797
    %v1046 = vpack.c.b16 %v806, %v802
    %v1047 = vpack.c.b16 %v807, %v803
    %v1048 = vpack.c.b16 %v808, %v804
    %v1049 = vpack.c.b16 %v809, %v805
    %v1050 = vpack.c.b16 %v814, %v810
    %v1051 = vpack.c.b16 %v815, %v811
    %v1052 = vpack.c.b16 %v816, %v812
    %v1053 = vpack.c.b16 %v817, %v813
    %v1054 = vpack.c.b16 %v822, %v818
    %v1055 = vpack.c.b16 %v823, %v819
    %v1056 = vpack.c.b16 %v824, %v820
    %v1057 = vpack.c.b16 %v825, %v821
    %v1058 = vpack.c.b16 %v830, %v826
    %v1059 = vpack.c.b16 %v831, %v827
    %v1060 = vpack.c.b16 %v832, %v828
    %v1061 = vpack.c.b16 %v833, %v829
    %v1062 = vpack.c.b16 %v838, %v834
    %v1063 = vpack.c.b16 %v839, %v835
    %v1064 = vpack.c.b16 %v840, %v836
    %v1065 = vpack.c.b16 %v841, %v837
    %v1066 = vpack.c.b16 %v846, %v842
    %v1067 = vpack.c.b16 %v847, %v843
    %v1068 = vpack.c.b16 %v848, %v844
    %v1069 = vpack.c.b16 %v849, %v845
    %v1070 = vpack.c.b16 %v854, %v850
    %v1071 = vpack.c.b16 %v855, %v851
    %v1072 = vpack.c.b16 %v856, %v852
    %v1073 = vpack.c.b16 %v857, %v853
    %v1074 = vpack.c.b16 %v862, %v858
    %v1075 = vpack.c.b16 %v863, %v859
    %v1076 = vpack.c.b16 %v864, %v860
    %v1077 = vpack.c.b16 %v865, %v861
    %v1078 = vpack.c.b16 %v870, %v866
    %v1079 = vpack.c.b16 %v871, %v867
    %v1080 = vpack.c.b16 %v872, %v868
    %v1081 = vpack.c.b16 %v873, %v869
    %v1082 = vpack.c.b16 %v878, %v874
    %v1083 = vpack.c.b16 %v879, %v875
    %v1084 = vpack.c.b16 %v880, %v876
    %v1085 = vpack.c.b16 %v881, %v877
    %v1086 = vpack.c.b16 %v886, %v882
    %v1087 = vpack.c.b16 %v887, %v883
    %v1088 = vpack.c.b16 %v888, %v884
    %v1089 = vpack.c.b16 %v889, %v885
    %v1090 = vpack.c.b16 %v894, %v890
    %v1091 = vpack.c.b16 %v895, %v891
    %v1092 = vpack.c.b16 %v896, %v892
    %v1093 = vpack.c.b16 %v897, %v893
    %vm1290 = vcmask 130048
    %v1292 = vsel %vm1290, %v303, 0
    %1294 = vmatprep.subr.bf16.mxu0 %v927
    %1295 = vmatpush1.bf16.msra.mxu0 %v926
    %1296 = vmatprep.subr.bf16.mxu0 %v923
    %1297 = vmatpush1.bf16.msra.mxu0 %v922
    %1298 = vmatprep.subr.bf16.mxu0 %v919
    %1299 = vmatpush1.bf16.msra.mxu0 %v918
    %1300 = vmatprep.subr.bf16.mxu0 %v915
    %1301 = vmatpush1.bf16.msra.mxu0 %v914
    %1302 = vmatprep.subr.bf16.mxu0 %v911
    %1303 = vmatpush1.bf16.msra.mxu0 %v910
    %1304 = vmatprep.subr.bf16.mxu0 %v907
    %1305 = vmatpush1.bf16.msra.mxu0 %v906
    %1306 = vmatprep.subr.bf16.mxu0 %v903
    %1307 = vmatpush1.bf16.msra.mxu0 %v902
    %1308 = vmatprep.subr.bf16.mxu0 %v899
    %1309 = vmatpush1.bf16.msra.mxu0 %v898
    %1310 = vmatprep.subr.bf16.mxu0 %v959
    %1311 = vmatpush2.bf16.msra.mxu0 %v958
    %1312 = vmatprep.subr.bf16.mxu0 %v955
    %1313 = vmatpush2.bf16.msra.mxu0 %v954
    %1314 = vmatprep.subr.bf16.mxu0 %v951
    %1315 = vmatpush2.bf16.msra.mxu0 %v950
    %1316 = vmatprep.subr.bf16.mxu0 %v947
    %1317 = vmatpush2.bf16.msra.mxu0 %v946
    %1318 = vmatprep.subr.bf16.mxu0 %v943
    %1319 = vmatpush2.bf16.msra.mxu0 %v942
    %1320 = vmatprep.subr.bf16.mxu0 %v939
    %1321 = vmatpush2.bf16.msra.mxu0 %v938
    %1322 = vmatprep.subr.bf16.mxu0 %v935
    %1323 = vmatpush2.bf16.msra.mxu0 %v934
    %1324 = vmatprep.subr.bf16.mxu0 %v931
    %1325 = vmatpush2.bf16.msra.mxu0 %v930
    %1326 = vmatprep.mubr.bf16.mxu0 %v298
    %1327 = vmatmul.mubr.bf16.gmra.mxu0 %v297
    %v1328 = vpop.f32.mrf.mxu0
    %v1329 = vadd.f32 %v258, %v1328
    %v1330 = vpop.f32.mrf.mxu0
    %v1331 = vadd.f32 %v262, %v1330
    %v1332 = vpop.f32.mrf.mxu0
    %v1333 = vadd.f32 %v258, %v1332
    %v1334 = vpop.f32.mrf.mxu0
    %v1335 = vadd.f32 %v262, %v1334
    %1336 = vdwg.mxu0
    %1337 = vmatprep.subr.bf16.mxu0 %v991
    %1338 = vmatpush1.bf16.msra.mxu0 %v990
    %1339 = vmatprep.subr.bf16.mxu0 %v987
    %1340 = vmatpush1.bf16.msra.mxu0 %v986
    %1341 = vmatprep.subr.bf16.mxu0 %v983
    %1342 = vmatpush1.bf16.msra.mxu0 %v982
    %1343 = vmatprep.subr.bf16.mxu0 %v979
    %1344 = vmatpush1.bf16.msra.mxu0 %v978
    %1345 = vmatprep.subr.bf16.mxu0 %v975
    %1346 = vmatpush1.bf16.msra.mxu0 %v974
    %1347 = vmatprep.subr.bf16.mxu0 %v971
    %1348 = vmatpush1.bf16.msra.mxu0 %v970
    %1349 = vmatprep.subr.bf16.mxu0 %v967
    %1350 = vmatpush1.bf16.msra.mxu0 %v966
    %1351 = vmatprep.subr.bf16.mxu0 %v963
    %1352 = vmatpush1.bf16.msra.mxu0 %v962
    %1353 = vmatprep.subr.bf16.mxu0 %v1023
    %1354 = vmatpush2.bf16.msra.mxu0 %v1022
    %1355 = vmatprep.subr.bf16.mxu0 %v1019
    %1356 = vmatpush2.bf16.msra.mxu0 %v1018
    %1357 = vmatprep.subr.bf16.mxu0 %v1015
    %1358 = vmatpush2.bf16.msra.mxu0 %v1014
    %1359 = vmatprep.subr.bf16.mxu0 %v1011
    %1360 = vmatpush2.bf16.msra.mxu0 %v1010
    %1361 = vmatprep.subr.bf16.mxu0 %v1007
    %1362 = vmatpush2.bf16.msra.mxu0 %v1006
    %1363 = vmatprep.subr.bf16.mxu0 %v1003
    %1364 = vmatpush2.bf16.msra.mxu0 %v1002
    %1365 = vmatprep.subr.bf16.mxu0 %v999
    %1366 = vmatpush2.bf16.msra.mxu0 %v998
    %1367 = vmatprep.subr.bf16.mxu0 %v995
    %1368 = vmatpush2.bf16.msra.mxu0 %v994
    %1369 = vmatprep.mubr.bf16.mxu0 %v300
    %1370 = vmatmul.mubr.bf16.gmra.mxu0 %v299
    %v1371 = vpop.f32.mrf.mxu0
    %v1372 = vadd.f32 %v1329, %v1371
    %v1373 = vpop.f32.mrf.mxu0
    %v1374 = vadd.f32 %v1331, %v1373
    %v1375 = vpop.f32.mrf.mxu0
    %v1376 = vadd.f32 %v1333, %v1375
    %v1377 = vpop.f32.mrf.mxu0
    %v1378 = vadd.f32 %v1335, %v1377
    %1379 = vdwg.mxu0
    %1380 = vmatprep.subr.bf16.mxu0 %v1055
    %1381 = vmatpush1.bf16.msra.mxu0 %v1054
    %1382 = vmatprep.subr.bf16.mxu0 %v1051
    %1383 = vmatpush1.bf16.msra.mxu0 %v1050
    %1384 = vmatprep.subr.bf16.mxu0 %v1047
    %1385 = vmatpush1.bf16.msra.mxu0 %v1046
    %1386 = vmatprep.subr.bf16.mxu0 %v1043
    %1387 = vmatpush1.bf16.msra.mxu0 %v1042
    %1388 = vmatprep.subr.bf16.mxu0 %v1039
    %1389 = vmatpush1.bf16.msra.mxu0 %v1038
    %1390 = vmatprep.subr.bf16.mxu0 %v1035
    %1391 = vmatpush1.bf16.msra.mxu0 %v1034
    %1392 = vmatprep.subr.bf16.mxu0 %v1031
    %1393 = vmatpush1.bf16.msra.mxu0 %v1030
    %1394 = vmatprep.subr.bf16.mxu0 %v1027
    %1395 = vmatpush1.bf16.msra.mxu0 %v1026
    %1396 = vmatprep.subr.bf16.mxu0 %v1087
    %1397 = vmatpush2.bf16.msra.mxu0 %v1086
    %1398 = vmatprep.subr.bf16.mxu0 %v1083
    %1399 = vmatpush2.bf16.msra.mxu0 %v1082
    %1400 = vmatprep.subr.bf16.mxu0 %v1079
    %1401 = vmatpush2.bf16.msra.mxu0 %v1078
    %1402 = vmatprep.subr.bf16.mxu0 %v1075
    %1403 = vmatpush2.bf16.msra.mxu0 %v1074
    %1404 = vmatprep.subr.bf16.mxu0 %v1071
    %1405 = vmatpush2.bf16.msra.mxu0 %v1070
    %1406 = vmatprep.subr.bf16.mxu0 %v1067
    %1407 = vmatpush2.bf16.msra.mxu0 %v1066
    %1408 = vmatprep.subr.bf16.mxu0 %v1063
    %1409 = vmatpush2.bf16.msra.mxu0 %v1062
    %1410 = vmatprep.subr.bf16.mxu0 %v1059
    %1411 = vmatpush2.bf16.msra.mxu0 %v1058
    %1412 = vmatprep.mubr.bf16.mxu0 %v302
    %1413 = vmatmul.mubr.bf16.gmra.mxu0 %v301
    %v1414 = vpop.f32.mrf.mxu0
    %v1415 = vadd.f32 %v1372, %v1414
    %v1416 = vpop.f32.mrf.mxu0
    %v1417 = vadd.f32 %v1374, %v1416
    %v1418 = vpop.f32.mrf.mxu0
    %v1419 = vadd.f32 %v1376, %v1418
    %v1420 = vpop.f32.mrf.mxu0
    %v1421 = vadd.f32 %v1378, %v1420
    %1422 = vdwg.mxu0
    %1423 = vmatprep.subr.bf16.mxu0 0
    %1424 = vmatpush1.bf16.msra.mxu0 0
    %1425 = vmatprep.subr.bf16.mxu0 0
    %1426 = vmatpush1.bf16.msra.mxu0 0
    %1427 = vmatprep.subr.bf16.mxu0 0
    %1428 = vmatpush1.bf16.msra.mxu0 0
    %1429 = vmatprep.subr.bf16.mxu0 0
    %1430 = vmatpush1.bf16.msra.mxu0 0
    %1431 = vmatprep.subr.bf16.mxu0 0
    %1432 = vmatpush1.bf16.msra.mxu0 0
    %1433 = vmatprep.subr.bf16.mxu0 0
    %1434 = vmatpush1.bf16.msra.mxu0 0
    %1435 = vmatprep.subr.bf16.mxu0 0
    %1436 = vmatpush1.bf16.msra.mxu0 0
    %1437 = vmatprep.subr.bf16.mxu0 %v1091
    %1438 = vmatpush1.bf16.msra.mxu0 %v1090
    %1439 = vmatprep.subr.bf16.mxu0 0
    %1440 = vmatpush2.bf16.msra.mxu0 0
    %1441 = vmatprep.subr.bf16.mxu0 0
    %1442 = vmatpush2.bf16.msra.mxu0 0
    %1443 = vmatprep.subr.bf16.mxu0 0
    %1444 = vmatpush2.bf16.msra.mxu0 0
    %1445 = vmatprep.subr.bf16.mxu0 0
    %1446 = vmatpush2.bf16.msra.mxu0 0
    %1447 = vmatprep.subr.bf16.mxu0 0
    %1448 = vmatpush2.bf16.msra.mxu0 0
    %1449 = vmatprep.subr.bf16.mxu0 0
    %1450 = vmatpush2.bf16.msra.mxu0 0
    %1451 = vmatprep.subr.bf16.mxu0 0
    %1452 = vmatpush2.bf16.msra.mxu0 0
    %1453 = vmatprep.subr.bf16.mxu0 0
    %1454 = vmatpush2.bf16.msra.mxu0 0
    %1455 = vmatprep.mubr.bf16.mxu0 0
    %1456 = vmatmul.mubr.bf16.gmra.mxu0 %v1292
    %v1457 = vpop.f32.mrf.mxu0
    %v1458 = vadd.f32 %v1415, %v1457
    %v1459 = vpop.f32.mrf.mxu0
    %v1460 = vadd.f32 %v1417, %v1459
    %v1461 = vpop.f32.mrf.mxu0
    %v1462 = vadd.f32 %v1419, %v1461
    %v1463 = vpop.f32.mrf.mxu0
    %v1464 = vadd.f32 %v1421, %v1463
    %1465 = vdwg.mxu0
    %1466 = vmatprep.subr.bf16.mxu0 %v929
    %1467 = vmatpush1.bf16.msra.mxu0 %v928
    %1468 = vmatprep.subr.bf16.mxu0 %v925
    %1469 = vmatpush1.bf16.msra.mxu0 %v924
    %1470 = vmatprep.subr.bf16.mxu0 %v921
    %1471 = vmatpush1.bf16.msra.mxu0 %v920
    %1472 = vmatprep.subr.bf16.mxu0 %v917
    %1473 = vmatpush1.bf16.msra.mxu0 %v916
    %1474 = vmatprep.subr.bf16.mxu0 %v913
    %1475 = vmatpush1.bf16.msra.mxu0 %v912
    %1476 = vmatprep.subr.bf16.mxu0 %v909
    %1477 = vmatpush1.bf16.msra.mxu0 %v908
    %1478 = vmatprep.subr.bf16.mxu0 %v905
    %1479 = vmatpush1.bf16.msra.mxu0 %v904
    %1480 = vmatprep.subr.bf16.mxu0 %v901
    %1481 = vmatpush1.bf16.msra.mxu0 %v900
    %1482 = vmatprep.subr.bf16.mxu0 %v961
    %1483 = vmatpush2.bf16.msra.mxu0 %v960
    %1484 = vmatprep.subr.bf16.mxu0 %v957
    %1485 = vmatpush2.bf16.msra.mxu0 %v956
    %1486 = vmatprep.subr.bf16.mxu0 %v953
    %1487 = vmatpush2.bf16.msra.mxu0 %v952
    %1488 = vmatprep.subr.bf16.mxu0 %v949
    %1489 = vmatpush2.bf16.msra.mxu0 %v948
    %1490 = vmatprep.subr.bf16.mxu0 %v945
    %1491 = vmatpush2.bf16.msra.mxu0 %v944
    %1492 = vmatprep.subr.bf16.mxu0 %v941
    %1493 = vmatpush2.bf16.msra.mxu0 %v940
    %1494 = vmatprep.subr.bf16.mxu0 %v937
    %1495 = vmatpush2.bf16.msra.mxu0 %v936
    %1496 = vmatprep.subr.bf16.mxu0 %v933
    %1497 = vmatpush2.bf16.msra.mxu0 %v932
    %1498 = vmatprep.mubr.bf16.mxu0 %v298
    %1499 = vmatmul.mubr.bf16.gmra.mxu0 %v297
    %v1500 = vpop.f32.mrf.mxu0
    %v1501 = vadd.f32 %v266, %v1500
    %v1502 = vpop.f32.mrf.mxu0
    %v1503 = vadd.f32 %v270, %v1502
    %v1504 = vpop.f32.mrf.mxu0
    %v1505 = vadd.f32 %v266, %v1504
    %v1506 = vpop.f32.mrf.mxu0
    %v1507 = vadd.f32 %v270, %v1506
    %1508 = vdwg.mxu0
    %1509 = vmatprep.subr.bf16.mxu0 %v993
    %1510 = vmatpush1.bf16.msra.mxu0 %v992
    %1511 = vmatprep.subr.bf16.mxu0 %v989
    %1512 = vmatpush1.bf16.msra.mxu0 %v988
    %1513 = vmatprep.subr.bf16.mxu0 %v985
    %1514 = vmatpush1.bf16.msra.mxu0 %v984
    %1515 = vmatprep.subr.bf16.mxu0 %v981
    %1516 = vmatpush1.bf16.msra.mxu0 %v980
    %1517 = vmatprep.subr.bf16.mxu0 %v977
    %1518 = vmatpush1.bf16.msra.mxu0 %v976
    %1519 = vmatprep.subr.bf16.mxu0 %v973
    %1520 = vmatpush1.bf16.msra.mxu0 %v972
    %1521 = vmatprep.subr.bf16.mxu0 %v969
    %1522 = vmatpush1.bf16.msra.mxu0 %v968
    %1523 = vmatprep.subr.bf16.mxu0 %v965
    %1524 = vmatpush1.bf16.msra.mxu0 %v964
    %1525 = vmatprep.subr.bf16.mxu0 %v1025
    %1526 = vmatpush2.bf16.msra.mxu0 %v1024
    %1527 = vmatprep.subr.bf16.mxu0 %v1021
    %1528 = vmatpush2.bf16.msra.mxu0 %v1020
    %1529 = vmatprep.subr.bf16.mxu0 %v1017
    %1530 = vmatpush2.bf16.msra.mxu0 %v1016
    %1531 = vmatprep.subr.bf16.mxu0 %v1013
    %1532 = vmatpush2.bf16.msra.mxu0 %v1012
    %1533 = vmatprep.subr.bf16.mxu0 %v1009
    %1534 = vmatpush2.bf16.msra.mxu0 %v1008
    %1535 = vmatprep.subr.bf16.mxu0 %v1005
    %1536 = vmatpush2.bf16.msra.mxu0 %v1004
    %1537 = vmatprep.subr.bf16.mxu0 %v1001
    %1538 = vmatpush2.bf16.msra.mxu0 %v1000
    %1539 = vmatprep.subr.bf16.mxu0 %v997
    %1540 = vmatpush2.bf16.msra.mxu0 %v996
    %1541 = vmatprep.mubr.bf16.mxu0 %v300
    %1542 = vmatmul.mubr.bf16.gmra.mxu0 %v299
    %v1543 = vpop.f32.mrf.mxu0
    %v1544 = vadd.f32 %v1501, %v1543
    %v1545 = vpop.f32.mrf.mxu0
    %v1546 = vadd.f32 %v1503, %v1545
    %v1547 = vpop.f32.mrf.mxu0
    %v1548 = vadd.f32 %v1505, %v1547
    %v1549 = vpop.f32.mrf.mxu0
    %v1550 = vadd.f32 %v1507, %v1549
    %1551 = vdwg.mxu0
    %1552 = vmatprep.subr.bf16.mxu0 %v1057
    %1553 = vmatpush1.bf16.msra.mxu0 %v1056
    %1554 = vmatprep.subr.bf16.mxu0 %v1053
    %1555 = vmatpush1.bf16.msra.mxu0 %v1052
    %1556 = vmatprep.subr.bf16.mxu0 %v1049
    %1557 = vmatpush1.bf16.msra.mxu0 %v1048
    %1558 = vmatprep.subr.bf16.mxu0 %v1045
    %1559 = vmatpush1.bf16.msra.mxu0 %v1044
    %1560 = vmatprep.subr.bf16.mxu0 %v1041
    %1561 = vmatpush1.bf16.msra.mxu0 %v1040
    %1562 = vmatprep.subr.bf16.mxu0 %v1037
    %1563 = vmatpush1.bf16.msra.mxu0 %v1036
    %1564 = vmatprep.subr.bf16.mxu0 %v1033
    %1565 = vmatpush1.bf16.msra.mxu0 %v1032
    %1566 = vmatprep.subr.bf16.mxu0 %v1029
    %1567 = vmatpush1.bf16.msra.mxu0 %v1028
    %1568 = vmatprep.subr.bf16.mxu0 %v1089
    %1569 = vmatpush2.bf16.msra.mxu0 %v1088
    %1570 = vmatprep.subr.bf16.mxu0 %v1085
    %1571 = vmatpush2.bf16.msra.mxu0 %v1084
    %1572 = vmatprep.subr.bf16.mxu0 %v1081
    %1573 = vmatpush2.bf16.msra.mxu0 %v1080
    %1574 = vmatprep.subr.bf16.mxu0 %v1077
    %1575 = vmatpush2.bf16.msra.mxu0 %v1076
    %1576 = vmatprep.subr.bf16.mxu0 %v1073
    %1577 = vmatpush2.bf16.msra.mxu0 %v1072
    %1578 = vmatprep.subr.bf16.mxu0 %v1069
    %1579 = vmatpush2.bf16.msra.mxu0 %v1068
    %1580 = vmatprep.subr.bf16.mxu0 %v1065
    %1581 = vmatpush2.bf16.msra.mxu0 %v1064
    %1582 = vmatprep.subr.bf16.mxu0 %v1061
    %1583 = vmatpush2.bf16.msra.mxu0 %v1060
    %1584 = vmatprep.mubr.bf16.mxu0 %v302
    %1585 = vmatmul.mubr.bf16.gmra.mxu0 %v301
    %v1586 = vpop.f32.mrf.mxu0
    %v1587 = vadd.f32 %v1544, %v1586
    %v1588 = vpop.f32.mrf.mxu0
    %v1589 = vadd.f32 %v1546, %v1588
    %v1590 = vpop.f32.mrf.mxu0
    %v1591 = vadd.f32 %v1548, %v1590
    %v1592 = vpop.f32.mrf.mxu0
    %v1593 = vadd.f32 %v1550, %v1592
    %1594 = vdwg.mxu0
    %1595 = vmatprep.subr.bf16.mxu0 0
    %1596 = vmatpush1.bf16.msra.mxu0 0
    %1597 = vmatprep.subr.bf16.mxu0 0
    %1598 = vmatpush1.bf16.msra.mxu0 0
    %1599 = vmatprep.subr.bf16.mxu0 0
    %1600 = vmatpush1.bf16.msra.mxu0 0
    %1601 = vmatprep.subr.bf16.mxu0 0
    %1602 = vmatpush1.bf16.msra.mxu0 0
    %1603 = vmatprep.subr.bf16.mxu0 0
    %1604 = vmatpush1.bf16.msra.mxu0 0
    %1605 = vmatprep.subr.bf16.mxu0 0
    %1606 = vmatpush1.bf16.msra.mxu0 0
    %1607 = vmatprep.subr.bf16.mxu0 0
    %1608 = vmatpush1.bf16.msra.mxu0 0
    %1609 = vmatprep.subr.bf16.mxu0 %v1093
    %1610 = vmatpush1.bf16.msra.mxu0 %v1092
    %1611 = vmatprep.subr.bf16.mxu0 0
    %1612 = vmatpush2.bf16.msra.mxu0 0
    %1613 = vmatprep.subr.bf16.mxu0 0
    %1614 = vmatpush2.bf16.msra.mxu0 0
    %1615 = vmatprep.subr.bf16.mxu0 0
    %1616 = vmatpush2.bf16.msra.mxu0 0
    %1617 = vmatprep.subr.bf16.mxu0 0
    %1618 = vmatpush2.bf16.msra.mxu0 0
    %1619 = vmatprep.subr.bf16.mxu0 0
    %1620 = vmatpush2.bf16.msra.mxu0 0
    %1621 = vmatprep.subr.bf16.mxu0 0
    %1622 = vmatpush2.bf16.msra.mxu0 0
    %1623 = vmatprep.subr.bf16.mxu0 0
    %1624 = vmatpush2.bf16.msra.mxu0 0
    %1625 = vmatprep.subr.bf16.mxu0 0
    %1626 = vmatpush2.bf16.msra.mxu0 0
    %1627 = vmatprep.mubr.bf16.mxu0 0
    %1628 = vmatmul.mubr.bf16.gmra.mxu0 %v1292
    %v1629 = vpop.f32.mrf.mxu0
    %v1630 = vadd.f32 %v1587, %v1629
    %v1631 = vpop.f32.mrf.mxu0
    %v1632 = vadd.f32 %v1589, %v1631
    %v1633 = vpop.f32.mrf.mxu0
    %v1634 = vadd.f32 %v1591, %v1633
    %v1635 = vpop.f32.mrf.mxu0
    %v1636 = vadd.f32 %v1593, %v1635
    %1637 = vdwg.mxu0
    %v1638 = vmax.f32 %v1458, 0.0
    %v1639 = vmax.f32 %v1460, 0.0
    %v1640 = vmax.f32 %v1630, 0.0
    %v1641 = vmax.f32 %v1632, 0.0
    %v1642 = vmax.f32 %v1462, 0.0
    %v1643 = vmax.f32 %v1464, 0.0
    %v1644 = vmax.f32 %v1634, 0.0
    %v1645 = vmax.f32 %v1636, 0.0
    %v1646 = vpack.c.bf16 %v1642, %v1638
    %v1647 = vpack.c.bf16 %v1643, %v1639
    %v1648 = vpack.c.bf16 %v1644, %v1640
    %v1649 = vpack.c.bf16 %v1645, %v1641
    %v1650 = vld [vmem:[#allocation4] sm:$0xf]
    %v1651 = vld [vmem:[#allocation4 + $0x4] sm:$0xf]
    %v1652 = vld [vmem:[#allocation4 + $0x8] sm:$0xf]
    %v1653 = vld [vmem:[#allocation4 + $0xc] sm:$0xf]
    %v1654 = vld [vmem:[#allocation4 + $0x10] sm:$0xf]
    %v1655 = vld [vmem:[#allocation4 + $0x14] sm:$0xf]
    %v1656 = vld [vmem:[#allocation4 + $0x18] sm:$0xf]
    %v1657 = vld [vmem:[#allocation4 + $0x1c] sm:$0xf]
    %v1658 = vld [vmem:[#allocation4 + $0x20] sm:$0xf]
    %v1659 = vld [vmem:[#allocation4 + $0x24] sm:$0xf]
    %v1660 = vld [vmem:[#allocation4 + $0x28] sm:$0xf]
    %v1661 = vld [vmem:[#allocation4 + $0x2c] sm:$0xf]
    %v1662 = vld [vmem:[#allocation4 + $0x30] sm:$0xf]
    %v1663 = vld [vmem:[#allocation4 + $0x34] sm:$0xf]
    %v1664 = vld [vmem:[#allocation4 + $0x38] sm:$0xf]
    %v1665 = vld [vmem:[#allocation4 + $0x3c] sm:$0xf]
    %v1666 = vld [vmem:[#allocation4 + $0x40] sm:$0xf]
    %v1667 = vld [vmem:[#allocation4 + $0x44] sm:$0xf]
    %v1668 = vld [vmem:[#allocation4 + $0x48] sm:$0xf]
    %v1669 = vld [vmem:[#allocation4 + $0x4c] sm:$0xf]
    %v1670 = vld [vmem:[#allocation4 + $0x50] sm:$0xf]
    %v1671 = vld [vmem:[#allocation4 + $0x54] sm:$0xf]
    %v1672 = vld [vmem:[#allocation4 + $0x58] sm:$0xf]
    %v1673 = vld [vmem:[#allocation4 + $0x5c] sm:$0xf]
    %v1674 = vld [vmem:[#allocation4 + $0x60] sm:$0xf]
    %v1675 = vld [vmem:[#allocation4 + $0x64] sm:$0xf]
    %v1676 = vld [vmem:[#allocation4 + $0x68] sm:$0xf]
    %v1677 = vld [vmem:[#allocation4 + $0x6c] sm:$0xf]
    %v1678 = vld [vmem:[#allocation4 + $0x70] sm:$0xf]
    %v1679 = vld [vmem:[#allocation4 + $0x74] sm:$0xf]
    %v1680 = vld [vmem:[#allocation4 + $0x78] sm:$0xf]
    %v1681 = vld [vmem:[#allocation4 + $0x7c] sm:$0xf]
    %v1682 = vld [vmem:[#allocation4 + $0x80] sm:$0xf]
    %v1683 = vld [vmem:[#allocation4 + $0x84] sm:$0xf]
    %v1684 = vld [vmem:[#allocation4 + $0x88] sm:$0xf]
    %v1685 = vld [vmem:[#allocation4 + $0x8c] sm:$0xf]
    %v1686 = vld [vmem:[#allocation4 + $0x90] sm:$0xf]
    %v1687 = vld [vmem:[#allocation4 + $0x94] sm:$0xf]
    %v1688 = vld [vmem:[#allocation4 + $0x98] sm:$0xf]
    %v1689 = vld [vmem:[#allocation4 + $0x9c] sm:$0xf]
    %v1690 = vld [vmem:[#allocation4 + $0xa0] sm:$0xf]
    %v1691 = vld [vmem:[#allocation4 + $0xa4] sm:$0xf]
    %v1692 = vld [vmem:[#allocation4 + $0xa8] sm:$0xf]
    %v1693 = vld [vmem:[#allocation4 + $0xac] sm:$0xf]
    %v1694 = vld [vmem:[#allocation4 + $0xb0] sm:$0xf]
    %v1695 = vld [vmem:[#allocation4 + $0xb4] sm:$0xf]
    %v1696 = vld [vmem:[#allocation4 + $0xb8] sm:$0xf]
    %v1697 = vld [vmem:[#allocation4 + $0xbc] sm:$0xf]
    %v1698 = vld [vmem:[#allocation4 + $0xc0] sm:$0xf]
    %v1699 = vld [vmem:[#allocation4 + $0xc4] sm:$0xf]
    %v1700 = vld [vmem:[#allocation4 + $0xc8] sm:$0xf]
    %v1701 = vld [vmem:[#allocation4 + $0xcc] sm:$0xf]
    %v1702 = vld [vmem:[#allocation4 + $0xd0] sm:$0xf]
    %v1703 = vld [vmem:[#allocation4 + $0xd4] sm:$0xf]
    %v1704 = vld [vmem:[#allocation4 + $0xd8] sm:$0xf]
    %v1705 = vld [vmem:[#allocation4 + $0xdc] sm:$0xf]
    %v1706 = vld [vmem:[#allocation4 + $0xe0] sm:$0xf]
    %v1707 = vld [vmem:[#allocation4 + $0xe4] sm:$0xf]
    %v1708 = vld [vmem:[#allocation4 + $0xe8] sm:$0xf]
    %v1709 = vld [vmem:[#allocation4 + $0xec] sm:$0xf]
    %v1710 = vld [vmem:[#allocation4 + $0xf0] sm:$0xf]
    %v1711 = vld [vmem:[#allocation4 + $0xf4] sm:$0xf]
    %v1712 = vld [vmem:[#allocation4 + $0xf8] sm:$0xf]
    %v1713 = vld [vmem:[#allocation4 + $0xfc] sm:$0xf]
    %v1714 = vld [vmem:[%s4] sm:$0x1]
    %v1716 = vlaneseq
    %v1717 = vshrl.u32 %v1716, 7
    %v1718 = vsub.s32 0, %v1717
    %v1719 = vrot.slane %v1714, %v1718
    %v1785 = vunpack.c.l.b16 %v1650
    %v1786 = vunpack.c.l.b16 %v1651
    %v1787 = vunpack.c.l.b16 %v1652
    %v1788 = vunpack.c.l.b16 %v1653
    %v1789 = vunpack.c.l.b16 %v1654
    %v1790 = vunpack.c.l.b16 %v1655
    %v1791 = vunpack.c.l.b16 %v1656
    %v1792 = vunpack.c.l.b16 %v1657
    %v1793 = vunpack.c.l.b16 %v1658
    %v1794 = vunpack.c.l.b16 %v1659
    %v1795 = vunpack.c.l.b16 %v1660
    %v1796 = vunpack.c.l.b16 %v1661
    %v1797 = vunpack.c.l.b16 %v1662
    %v1798 = vunpack.c.l.b16 %v1663
    %v1799 = vunpack.c.l.b16 %v1664
    %v1800 = vunpack.c.l.b16 %v1665
    %v1801 = vunpack.c.l.b16 %v1666
    %v1802 = vunpack.c.l.b16 %v1667
    %v1803 = vunpack.c.l.b16 %v1668
    %v1804 = vunpack.c.l.b16 %v1669
    %v1805 = vunpack.c.l.b16 %v1670
    %v1806 = vunpack.c.l.b16 %v1671
    %v1807 = vunpack.c.l.b16 %v1672
    %v1808 = vunpack.c.l.b16 %v1673
    %v1809 = vunpack.c.l.b16 %v1674
    %v1810 = vunpack.c.l.b16 %v1675
    %v1811 = vunpack.c.l.b16 %v1676
    %v1812 = vunpack.c.l.b16 %v1677
    %v1813 = vunpack.c.l.b16 %v1678
    %v1814 = vunpack.c.l.b16 %v1679
    %v1815 = vunpack.c.l.b16 %v1680
    %v1816 = vunpack.c.l.b16 %v1681
    %v1817 = vunpack.c.l.b16 %v1682
    %v1818 = vunpack.c.l.b16 %v1683
    %v1819 = vunpack.c.l.b16 %v1684
    %v1820 = vunpack.c.l.b16 %v1685
    %v1821 = vunpack.c.l.b16 %v1686
    %v1822 = vunpack.c.l.b16 %v1687
    %v1823 = vunpack.c.l.b16 %v1688
    %v1824 = vunpack.c.l.b16 %v1689
    %v1825 = vunpack.c.l.b16 %v1690
    %v1826 = vunpack.c.l.b16 %v1691
    %v1827 = vunpack.c.l.b16 %v1692
    %v1828 = vunpack.c.l.b16 %v1693
    %v1829 = vunpack.c.l.b16 %v1694
    %v1830 = vunpack.c.l.b16 %v1695
    %v1831 = vunpack.c.l.b16 %v1696
    %v1832 = vunpack.c.l.b16 %v1697
    %v1833 = vunpack.c.l.b16 %v1698
    %v1834 = vunpack.c.l.b16 %v1699
    %v1835 = vunpack.c.l.b16 %v1700
    %v1836 = vunpack.c.l.b16 %v1701
    %v1837 = vunpack.c.l.b16 %v1702
    %v1838 = vunpack.c.l.b16 %v1703
    %v1839 = vunpack.c.l.b16 %v1704
    %v1840 = vunpack.c.l.b16 %v1705
    %v1841 = vunpack.c.l.b16 %v1706
    %v1842 = vunpack.c.l.b16 %v1707
    %v1843 = vunpack.c.l.b16 %v1708
    %v1844 = vunpack.c.l.b16 %v1709
    %v1845 = vunpack.c.l.b16 %v1710
    %v1846 = vunpack.c.l.b16 %v1711
    %v1847 = vunpack.c.l.b16 %v1712
    %v1848 = vunpack.c.l.b16 %v1713
    %v1849 = vpack.c.b16 %v1786, %v1785
    %v1850 = vpack.c.b16 %v1788, %v1787
    %v1851 = vpack.c.b16 %v1790, %v1789
    %v1852 = vpack.c.b16 %v1792, %v1791
    %v1853 = vpack.c.b16 %v1794, %v1793
    %v1854 = vpack.c.b16 %v1796, %v1795
    %v1855 = vpack.c.b16 %v1798, %v1797
    %v1856 = vpack.c.b16 %v1800, %v1799
    %v1857 = vpack.c.b16 %v1802, %v1801
    %v1858 = vpack.c.b16 %v1804, %v1803
    %v1859 = vpack.c.b16 %v1806, %v1805
    %v1860 = vpack.c.b16 %v1808, %v1807
    %v1861 = vpack.c.b16 %v1810, %v1809
    %v1862 = vpack.c.b16 %v1812, %v1811
    %v1863 = vpack.c.b16 %v1814, %v1813
    %v1864 = vpack.c.b16 %v1816, %v1815
    %v1865 = vpack.c.b16 %v1818, %v1817
    %v1866 = vpack.c.b16 %v1820, %v1819
    %v1867 = vpack.c.b16 %v1822, %v1821
    %v1868 = vpack.c.b16 %v1824, %v1823
    %v1869 = vpack.c.b16 %v1826, %v1825
    %v1870 = vpack.c.b16 %v1828, %v1827
    %v1871 = vpack.c.b16 %v1830, %v1829
    %v1872 = vpack.c.b16 %v1832, %v1831
    %v1873 = vpack.c.b16 %v1834, %v1833
    %v1874 = vpack.c.b16 %v1836, %v1835
    %v1875 = vpack.c.b16 %v1838, %v1837
    %v1876 = vpack.c.b16 %v1840, %v1839
    %v1877 = vpack.c.b16 %v1842, %v1841
    %v1878 = vpack.c.b16 %v1844, %v1843
    %v1879 = vpack.c.b16 %v1846, %v1845
    %v1880 = vpack.c.b16 %v1848, %v1847
    %1913 = vmatprep.subr.bf16.mxu0 0
    %1914 = vmatpush1.bf16.msra.mxu0 %v1856
    %1915 = vmatprep.subr.bf16.mxu0 0
    %1916 = vmatpush1.bf16.msra.mxu0 %v1855
    %1917 = vmatprep.subr.bf16.mxu0 0
    %1918 = vmatpush1.bf16.msra.mxu0 %v1854
    %1919 = vmatprep.subr.bf16.mxu0 0
    %1920 = vmatpush1.bf16.msra.mxu0 %v1853
    %1921 = vmatprep.subr.bf16.mxu0 0
    %1922 = vmatpush1.bf16.msra.mxu0 %v1852
    %1923 = vmatprep.subr.bf16.mxu0 0
    %1924 = vmatpush1.bf16.msra.mxu0 %v1851
    %1925 = vmatprep.subr.bf16.mxu0 0
    %1926 = vmatpush1.bf16.msra.mxu0 %v1850
    %1927 = vmatprep.subr.bf16.mxu0 0
    %1928 = vmatpush1.bf16.msra.mxu0 %v1849
    %1929 = vmatprep.subr.bf16.mxu0 0
    %1930 = vmatpush2.bf16.msra.mxu0 %v1864
    %1931 = vmatprep.subr.bf16.mxu0 0
    %1932 = vmatpush2.bf16.msra.mxu0 %v1863
    %1933 = vmatprep.subr.bf16.mxu0 0
    %1934 = vmatpush2.bf16.msra.mxu0 %v1862
    %1935 = vmatprep.subr.bf16.mxu0 0
    %1936 = vmatpush2.bf16.msra.mxu0 %v1861
    %1937 = vmatprep.subr.bf16.mxu0 0
    %1938 = vmatpush2.bf16.msra.mxu0 %v1860
    %1939 = vmatprep.subr.bf16.mxu0 0
    %1940 = vmatpush2.bf16.msra.mxu0 %v1859
    %1941 = vmatprep.subr.bf16.mxu0 0
    %1942 = vmatpush2.bf16.msra.mxu0 %v1858
    %1943 = vmatprep.subr.bf16.mxu0 0
    %1944 = vmatpush2.bf16.msra.mxu0 %v1857
    %1945 = vmatprep.mubr.bf16.mxu0 %v1647
    %1946 = vmatmul.mubr.bf16.gmra.mxu0 %v1646
    %v1947 = vpop.f32.mrf.mxu0
    %v1948 = vadd.f32 %v1719, %v1947
    %v1949 = vpop.f32.mrf.mxu0
    %v1950 = vpop.f32.mrf.mxu0
    %v1951 = vadd.f32 %v1719, %v1950
    %v1952 = vpop.f32.mrf.mxu0
    %1953 = vdwg.mxu0
    %1954 = vmatprep.subr.bf16.mxu0 0
    %1955 = vmatpush1.bf16.msra.mxu0 %v1872
    %1956 = vmatprep.subr.bf16.mxu0 0
    %1957 = vmatpush1.bf16.msra.mxu0 %v1871
    %1958 = vmatprep.subr.bf16.mxu0 0
    %1959 = vmatpush1.bf16.msra.mxu0 %v1870
    %1960 = vmatprep.subr.bf16.mxu0 0
    %1961 = vmatpush1.bf16.msra.mxu0 %v1869
    %1962 = vmatprep.subr.bf16.mxu0 0
    %1963 = vmatpush1.bf16.msra.mxu0 %v1868
    %1964 = vmatprep.subr.bf16.mxu0 0
    %1965 = vmatpush1.bf16.msra.mxu0 %v1867
    %1966 = vmatprep.subr.bf16.mxu0 0
    %1967 = vmatpush1.bf16.msra.mxu0 %v1866
    %1968 = vmatprep.subr.bf16.mxu0 0
    %1969 = vmatpush1.bf16.msra.mxu0 %v1865
    %1970 = vmatprep.subr.bf16.mxu0 0
    %1971 = vmatpush2.bf16.msra.mxu0 %v1880
    %1972 = vmatprep.subr.bf16.mxu0 0
    %1973 = vmatpush2.bf16.msra.mxu0 %v1879
    %1974 = vmatprep.subr.bf16.mxu0 0
    %1975 = vmatpush2.bf16.msra.mxu0 %v1878
    %1976 = vmatprep.subr.bf16.mxu0 0
    %1977 = vmatpush2.bf16.msra.mxu0 %v1877
    %1978 = vmatprep.subr.bf16.mxu0 0
    %1979 = vmatpush2.bf16.msra.mxu0 %v1876
    %1980 = vmatprep.subr.bf16.mxu0 0
    %1981 = vmatpush2.bf16.msra.mxu0 %v1875
    %1982 = vmatprep.subr.bf16.mxu0 0
    %1983 = vmatpush2.bf16.msra.mxu0 %v1874
    %1984 = vmatprep.subr.bf16.mxu0 0
    %1985 = vmatpush2.bf16.msra.mxu0 %v1873
    %1986 = vmatprep.mubr.bf16.mxu0 %v1649
    %1987 = vmatmul.mubr.bf16.gmra.mxu0 %v1648
    %v1988 = vpop.f32.mrf.mxu0
    %v1989 = vadd.f32 %v1948, %v1988
    %v1990 = vpop.f32.mrf.mxu0
    %v1991 = vpop.f32.mrf.mxu0
    %v1992 = vadd.f32 %v1951, %v1991
    %v1993 = vpop.f32.mrf.mxu0
    %1994 = vdwg.mxu0
    %1995 = vst [vmem:[%s5] sm:$0xff] %v1989
    %1996 = vst [vmem:[%s5 + $0x8] sm:$0xff] %v1992
    // Predicated region
    $region30: #{neural_net_forward.1} parent=1 // pred_check
      _
    $region31: #{neural_net_forward.1} parent=1 // pred_check_branch
      %1998 = sbr.rel (0) target = $region33
    $region32: #{neural_net_forward.1} parent=1 // pred_region
      _
    $region33: #{neural_net_forward.1} parent=1 // pred_fallthru
      _
    // Predicated region
    $region34: #{neural_net_forward.1} parent=1 // pred_check
      _
    $region35: #{neural_net_forward.1} parent=1 // pred_check_branch
      %2000 = sbr.rel (0) target = $region37
    $region36: #{neural_net_forward.1} parent=1 // pred_region
      _
    $region37: #{neural_net_forward.1} parent=1 // pred_fallthru
      _
    %2001 = vsyncpa [#allocation3], 1
    %2002 = vsyncpa [#allocation5], 1

</llo_original>
